<compile_context>
chip_gen: v7x
topology: tpu7x:2x2x1
jax: 0.10.0
libtpu: 0.0.40
codegen_flags: <defaults>
</compile_context>

<pallas_src>
import math

import jax
import jax.numpy as jnp
from jax.experimental import pallas as pl
from jax.experimental.pallas import tpu as pltpu

# --- model hyper-params (small, consistent with the module's forward) -------
B         = 2
WSEQ      = 8
PSEQ      = 8
WEMB_DIM  = 32           # Wemb_dim
PEMB_DIM  = 756          # linear_k / linear_v input dim is hard-coded to 756
NEW_DIM   = 32           # new_dim
NUM_HEADS = 4
HEAD_DIM  = NEW_DIM // NUM_HEADS
LN_EPS    = 1e-5


def cross_attention_kernel(x_ref, p_ref, mask_ref,
                           wq_ref, bq_ref,
                           wkv_ref, bkv_ref,
                           wc_ref, bc_ref,
                           gamma_ref, beta_ref,
                           out_ref):
    x = x_ref[...]                                   # (B*Wseq, Wemb_dim) f32
    p = p_ref[...]                                   # (B*Pseq, 756)      bf16
    neg_bias = mask_ref[...]                         # (B*Wseq, B*Pseq)   f32

    # Q projection (1/sqrt(head_dim) already folded into Wq/bq host-side).
    q = jnp.dot(x, wq_ref[...], preferred_element_type=jnp.float32) + bq_ref[...]

    # Fused K/V projection: single bf16 (756 x 64) MXU matmul, f32 accumulate.
    kv = jnp.dot(p, wkv_ref[...], preferred_element_type=jnp.float32) + bkv_ref[...]
    k = kv[:, :NEW_DIM]                              # (B*Pseq, new_dim)
    v = kv[:, NEW_DIM:]                              # (B*Pseq, new_dim)
    kt = k.T                                         # one transpose, reused by all heads

    # Per-head attention.  Instead of concatenating head outputs along lanes,
    # project each head through its slice of Wc^T and accumulate (equivalent).
    y = jnp.zeros((B * WSEQ, WEMB_DIM), jnp.float32)
    for h in range(NUM_HEADS):
        lo = h * HEAD_DIM
        qh = q[:, lo:lo + HEAD_DIM]                  # (16, 8)
        kth = kt[lo:lo + HEAD_DIM, :]                # (8, 16)
        vh = v[:, lo:lo + HEAD_DIM]                  # (16, 8)

        s = jnp.dot(qh, kth, preferred_element_type=jnp.float32) + neg_bias
        s = s - jnp.max(s, axis=-1, keepdims=True)
        e = jnp.exp(s)
        probs = e * pl.reciprocal(jnp.sum(e, axis=-1, keepdims=True), approx=True)

        oh = jnp.dot(probs, vh, preferred_element_type=jnp.float32)      # (16, 8)
        y = y + jnp.dot(oh, wc_ref[lo:lo + HEAD_DIM, :],
                        preferred_element_type=jnp.float32)              # (16, 32)

    # Output bias, residual and LayerNorm over the last dim.
    r = y + bc_ref[...] + x
    mean = jnp.mean(r, axis=-1, keepdims=True)
    var = jnp.mean((r - mean) ** 2, axis=-1, keepdims=True)
    normed = (r - mean) * jax.lax.rsqrt(var + LN_EPS)
    out_ref[...] = normed * gamma_ref[...] + beta_ref[...]


def cross_attention(wemb, pemb, params):
    wq, bq, wk, bk, wv, bv, wc, bc, gamma, beta = params
    scale = 1.0 / math.sqrt(HEAD_DIM)

    # Host-side packing: fold batch into sublanes, fold the softmax scale into
    # the Q projection, fuse K/V weights, cast the big operands to bf16.
    x2d = wemb.reshape(B * WSEQ, WEMB_DIM)
    p2d = pemb.reshape(B * PSEQ, PEMB_DIM).astype(jnp.bfloat16)
    wq_s = (wq * scale).astype(jnp.float32)
    bq_s = (bq * scale).astype(jnp.float32)
    wkv = jnp.concatenate([wk, wv], axis=1).astype(jnp.bfloat16)   # (756, 64)
    bkv = jnp.concatenate([bk, bv], axis=1)                        # (1, 64) f32

    # Block-diagonal additive mask: batch elements folded into sublanes must
    # never attend to each other.  Built host-side (constant-folded by XLA).
    rows = jnp.arange(B * WSEQ)[:, None] // WSEQ
    cols = jnp.arange(B * PSEQ)[None, :] // PSEQ
    neg_bias = jnp.where(rows == cols, 0.0, -1e30).astype(jnp.float32)

    args = (x2d, p2d, neg_bias, wq_s, bq_s, wkv, bkv, wc, bc, gamma, beta)

    flops = int(
        2 * (B * WSEQ) * WEMB_DIM * NEW_DIM                 # Q projection
        + 2 * (B * PSEQ) * PEMB_DIM * (2 * NEW_DIM)         # fused K/V projection
        + 2 * NUM_HEADS * (B * WSEQ) * (B * PSEQ) * HEAD_DIM * 2   # scores + P@V
        + 2 * NUM_HEADS * (B * WSEQ) * HEAD_DIM * WEMB_DIM)        # output projection
    transcendentals = NUM_HEADS * (B * WSEQ) * (B * PSEQ)
    bytes_accessed = int(sum(a.size * a.dtype.itemsize for a in args)
                         + B * WSEQ * WEMB_DIM * 4)
    cost = pl.CostEstimate(flops=flops,
                           transcendentals=transcendentals,
                           bytes_accessed=bytes_accessed)

    vmem = pl.BlockSpec(memory_space=pltpu.MemorySpace.VMEM)
    out2d = pl.pallas_call(
        cross_attention_kernel,
        out_shape=jax.ShapeDtypeStruct((B * WSEQ, WEMB_DIM), jnp.float32),
        in_specs=[vmem] * len(args),
        out_specs=vmem,
        cost_estimate=cost,
    )(*args)
    return out2d.reshape(B, WSEQ, WEMB_DIM)


def cross_attention_ref(wemb, pemb, params):
    """Pure-JAX f32 reference matching the PyTorch forward."""
    wq, bq, wk, bk, wv, bv, wc, bc, gamma, beta = params
    q = wemb @ wq + bq[0]
    k = pemb @ wk + bk[0]
    v = pemb @ wv + bv[0]
    q = q.reshape(B, WSEQ, NUM_HEADS, HEAD_DIM).transpose(0, 2, 1, 3)
    k = k.reshape(B, PSEQ, NUM_HEADS, HEAD_DIM).transpose(0, 2, 1, 3)
    v = v.reshape(B, PSEQ, NUM_HEADS, HEAD_DIM).transpose(0, 2, 1, 3)
    attn = (q @ k.transpose(0, 1, 3, 2)) / math.sqrt(HEAD_DIM)
    probs = jax.nn.softmax(attn, axis=-1)
    sim = (probs @ v).transpose(0, 2, 1, 3).reshape(B, WSEQ, NEW_DIM)
    y = sim @ wc + bc[0]
    r = y + wemb
    mean = r.mean(-1, keepdims=True)
    var = ((r - mean) ** 2).mean(-1, keepdims=True)
    return (r - mean) / jnp.sqrt(var + LN_EPS) * gamma[0] + beta[0]


def init_params(key):
    ks = jax.random.split(key, 8)

    def lin(kw, kb, fan_in, fan_out):
        bound = 1.0 / math.sqrt(fan_in)
        w_t = jax.random.uniform(kw, (fan_in, fan_out), jnp.float32, -bound, bound)
        b = jax.random.uniform(kb, (1, fan_out), jnp.float32, -bound, bound)
        return w_t, b

    wq, bq = lin(ks[0], ks[1], WEMB_DIM, NEW_DIM)
    wk, bk = lin(ks[2], ks[3], PEMB_DIM, NEW_DIM)
    wv, bv = lin(ks[4], ks[5], PEMB_DIM, NEW_DIM)
    wc, bc = lin(ks[6], ks[7], NEW_DIM, WEMB_DIM)
    gamma = jnp.ones((1, WEMB_DIM), jnp.float32)
    beta = jnp.zeros((1, WEMB_DIM), jnp.float32)
    return (wq, bq, wk, bk, wv, bv, wc, bc, gamma, beta)


if __name__ == "__main__":
    key = jax.random.PRNGKey(0)
    k_w, k_p, k_params = jax.random.split(key, 3)
    wemb = jax.random.normal(k_w, (B, WSEQ, WEMB_DIM), jnp.float32)
    pemb = jax.random.normal(k_p, (B, PSEQ, PEMB_DIM), jnp.float32)
    params = init_params(k_params)

    out = cross_attention(wemb, pemb, params)
    out = jax.block_until_ready(out)

    ref = cross_attention_ref(wemb, pemb, params)
    assert out.shape == (B, WSEQ, WEMB_DIM)
    # bf16 K/V path + approx reciprocal -> relaxed tolerance vs. the f32 reference.
    assert jnp.allclose(out, ref, atol=3e-2, rtol=3e-2), "mismatch vs reference"
    print("KERNEL_OK")
</pallas_src>

<mosaic_0001>
module attributes {stable_mosaic.version = 11 : i64} {
  func.func @cross_attention_kernel(%arg0: memref<16x32xf32, #tpu.memory_space<vmem>>, %arg1: memref<16x756xbf16, #tpu.memory_space<vmem>>, %arg2: memref<16x16xf32, #tpu.memory_space<vmem>>, %arg3: memref<32x32xf32, #tpu.memory_space<vmem>>, %arg4: memref<1x32xf32, #tpu.memory_space<vmem>>, %arg5: memref<756x64xbf16, #tpu.memory_space<vmem>>, %arg6: memref<1x64xf32, #tpu.memory_space<vmem>>, %arg7: memref<32x32xf32, #tpu.memory_space<vmem>>, %arg8: memref<1x32xf32, #tpu.memory_space<vmem>>, %arg9: memref<1x32xf32, #tpu.memory_space<vmem>>, %arg10: memref<1x32xf32, #tpu.memory_space<vmem>>, %arg11: memref<16x32xf32, #tpu.memory_space<vmem>>) attributes {dimension_semantics = [], scalar_prefetch = 0 : i64, scratch_operands = 0 : i64, tpu.core_type = #tpu.core_type<tc>} {
    %c0 = arith.constant 0 : index
    %c0_0 = arith.constant 0 : index
    %0 = vector.load %arg0[%c0, %c0_0] : memref<16x32xf32, #tpu.memory_space<vmem>>, vector<16x32xf32>
    %c0_1 = arith.constant 0 : index
    %c0_2 = arith.constant 0 : index
    %1 = vector.load %arg1[%c0_1, %c0_2] : memref<16x756xbf16, #tpu.memory_space<vmem>>, vector<16x756xbf16>
    %c0_3 = arith.constant 0 : index
    %c0_4 = arith.constant 0 : index
    %2 = vector.load %arg2[%c0_3, %c0_4] : memref<16x16xf32, #tpu.memory_space<vmem>>, vector<16x16xf32>
    %c0_5 = arith.constant 0 : index
    %c0_6 = arith.constant 0 : index
    %3 = vector.load %arg3[%c0_5, %c0_6] : memref<32x32xf32, #tpu.memory_space<vmem>>, vector<32x32xf32>
    %cst = arith.constant dense<0.000000e+00> : vector<16x32xf32>
    %4 = tpu.matmul %0, %3, %cst {dimension_numbers = #tpu.dot_dimension_numbers<[1], [0], [0], [1], [0, 0, 1, 1], [], []>} : vector<16x32xf32>, vector<32x32xf32>, vector<16x32xf32> -> vector<16x32xf32>
    %c0_7 = arith.constant 0 : index
    %c0_8 = arith.constant 0 : index
    %5 = vector.load %arg4[%c0_7, %c0_8] : memref<1x32xf32, #tpu.memory_space<vmem>>, vector<1x32xf32>
    %6 = vector.broadcast %5 : vector<1x32xf32> to vector<16x32xf32>
    %7 = arith.addf %4, %6 : vector<16x32xf32>
    %c0_9 = arith.constant 0 : index
    %c0_10 = arith.constant 0 : index
    %8 = vector.load %arg5[%c0_9, %c0_10] : memref<756x64xbf16, #tpu.memory_space<vmem>>, vector<756x64xbf16>
    %cst_11 = arith.constant dense<0.000000e+00> : vector<16x64xf32>
    %9 = tpu.matmul %1, %8, %cst_11 {dimension_numbers = #tpu.dot_dimension_numbers<[1], [0], [0], [1], [0, 0, 1, 1], [], []>} : vector<16x756xbf16>, vector<756x64xbf16>, vector<16x64xf32> -> vector<16x64xf32>
    %c0_12 = arith.constant 0 : index
    %c0_13 = arith.constant 0 : index
    %10 = vector.load %arg6[%c0_12, %c0_13] : memref<1x64xf32, #tpu.memory_space<vmem>>, vector<1x64xf32>
    %11 = vector.broadcast %10 : vector<1x64xf32> to vector<16x64xf32>
    %12 = arith.addf %9, %11 : vector<16x64xf32>
    %13 = vector.extract_strided_slice %12 {offsets = [0, 0], sizes = [16, 32], strides = [1, 1]} : vector<16x64xf32> to vector<16x32xf32>
    %14 = vector.extract_strided_slice %12 {offsets = [0, 32], sizes = [16, 32], strides = [1, 1]} : vector<16x64xf32> to vector<16x32xf32>
    %15 = tpu.transpose %13, [1, 0] : vector<16x32xf32> -> vector<32x16xf32>
    %cst_14 = arith.constant 0.000000e+00 : f32
    %16 = vector.broadcast %cst_14 : f32 to vector<16x32xf32>
    %17 = vector.extract_strided_slice %7 {offsets = [0, 0], sizes = [16, 8], strides = [1, 1]} : vector<16x32xf32> to vector<16x8xf32>
    %18 = vector.extract_strided_slice %15 {offsets = [0, 0], sizes = [8, 16], strides = [1, 1]} : vector<32x16xf32> to vector<8x16xf32>
    %19 = vector.extract_strided_slice %14 {offsets = [0, 0], sizes = [16, 8], strides = [1, 1]} : vector<16x32xf32> to vector<16x8xf32>
    %cst_15 = arith.constant dense<0.000000e+00> : vector<16x16xf32>
    %20 = tpu.matmul %17, %18, %cst_15 {dimension_numbers = #tpu.dot_dimension_numbers<[1], [0], [0], [1], [0, 0, 1, 1], [], []>} : vector<16x8xf32>, vector<8x16xf32>, vector<16x16xf32> -> vector<16x16xf32>
    %21 = arith.addf %20, %2 : vector<16x16xf32>
    %cst_16 = arith.constant dense<0xFF800000> : vector<16xf32>
    %22 = vector.multi_reduction <maximumf>, %21, %cst_16 [1] : vector<16x16xf32> to vector<16xf32>
    %23 = vector.shape_cast %22 : vector<16xf32> to vector<16x1xf32>
    %24 = vector.broadcast %23 : vector<16x1xf32> to vector<16x16xf32>
    %25 = arith.subf %21, %24 : vector<16x16xf32>
    %26 = math.exp %25 : vector<16x16xf32>
    %cst_17 = arith.constant dense<0.000000e+00> : vector<16xf32>
    %27 = vector.multi_reduction <add>, %26, %cst_17 [1] : vector<16x16xf32> to vector<16xf32>
    %28 = vector.shape_cast %27 : vector<16xf32> to vector<16x1xf32>
    %29 = tpu.reciprocal %28 {approx = true} : vector<16x1xf32> -> vector<16x1xf32>
    %30 = vector.broadcast %29 : vector<16x1xf32> to vector<16x16xf32>
    %31 = arith.mulf %26, %30 : vector<16x16xf32>
    %cst_18 = arith.constant dense<0.000000e+00> : vector<16x8xf32>
    %32 = tpu.matmul %31, %19, %cst_18 {dimension_numbers = #tpu.dot_dimension_numbers<[1], [0], [0], [1], [0, 0, 1, 1], [], []>} : vector<16x16xf32>, vector<16x8xf32>, vector<16x8xf32> -> vector<16x8xf32>
    %c0_19 = arith.constant 0 : index
    %c0_20 = arith.constant 0 : index
    %33 = vector.load %arg7[%c0_19, %c0_20] : memref<32x32xf32, #tpu.memory_space<vmem>>, vector<8x32xf32>
    %cst_21 = arith.constant dense<0.000000e+00> : vector<16x32xf32>
    %34 = tpu.matmul %32, %33, %cst_21 {dimension_numbers = #tpu.dot_dimension_numbers<[1], [0], [0], [1], [0, 0, 1, 1], [], []>} : vector<16x8xf32>, vector<8x32xf32>, vector<16x32xf32> -> vector<16x32xf32>
    %35 = arith.addf %16, %34 : vector<16x32xf32>
    %36 = vector.extract_strided_slice %7 {offsets = [0, 8], sizes = [16, 8], strides = [1, 1]} : vector<16x32xf32> to vector<16x8xf32>
    %37 = vector.extract_strided_slice %15 {offsets = [8, 0], sizes = [8, 16], strides = [1, 1]} : vector<32x16xf32> to vector<8x16xf32>
    %38 = vector.extract_strided_slice %14 {offsets = [0, 8], sizes = [16, 8], strides = [1, 1]} : vector<16x32xf32> to vector<16x8xf32>
    %cst_22 = arith.constant dense<0.000000e+00> : vector<16x16xf32>
    %39 = tpu.matmul %36, %37, %cst_22 {dimension_numbers = #tpu.dot_dimension_numbers<[1], [0], [0], [1], [0, 0, 1, 1], [], []>} : vector<16x8xf32>, vector<8x16xf32>, vector<16x16xf32> -> vector<16x16xf32>
    %40 = arith.addf %39, %2 : vector<16x16xf32>
    %cst_23 = arith.constant dense<0xFF800000> : vector<16xf32>
    %41 = vector.multi_reduction <maximumf>, %40, %cst_23 [1] : vector<16x16xf32> to vector<16xf32>
    %42 = vector.shape_cast %41 : vector<16xf32> to vector<16x1xf32>
    %43 = vector.broadcast %42 : vector<16x1xf32> to vector<16x16xf32>
    %44 = arith.subf %40, %43 : vector<16x16xf32>
    %45 = math.exp %44 : vector<16x16xf32>
    %cst_24 = arith.constant dense<0.000000e+00> : vector<16xf32>
    %46 = vector.multi_reduction <add>, %45, %cst_24 [1] : vector<16x16xf32> to vector<16xf32>
    %47 = vector.shape_cast %46 : vector<16xf32> to vector<16x1xf32>
    %48 = tpu.reciprocal %47 {approx = true} : vector<16x1xf32> -> vector<16x1xf32>
    %49 = vector.broadcast %48 : vector<16x1xf32> to vector<16x16xf32>
    %50 = arith.mulf %45, %49 : vector<16x16xf32>
    %cst_25 = arith.constant dense<0.000000e+00> : vector<16x8xf32>
    %51 = tpu.matmul %50, %38, %cst_25 {dimension_numbers = #tpu.dot_dimension_numbers<[1], [0], [0], [1], [0, 0, 1, 1], [], []>} : vector<16x16xf32>, vector<16x8xf32>, vector<16x8xf32> -> vector<16x8xf32>
    %c8 = arith.constant 8 : index
    %c0_26 = arith.constant 0 : index
    %52 = vector.load %arg7[%c8, %c0_26] : memref<32x32xf32, #tpu.memory_space<vmem>>, vector<8x32xf32>
    %cst_27 = arith.constant dense<0.000000e+00> : vector<16x32xf32>
    %53 = tpu.matmul %51, %52, %cst_27 {dimension_numbers = #tpu.dot_dimension_numbers<[1], [0], [0], [1], [0, 0, 1, 1], [], []>} : vector<16x8xf32>, vector<8x32xf32>, vector<16x32xf32> -> vector<16x32xf32>
    %54 = arith.addf %35, %53 : vector<16x32xf32>
    %55 = vector.extract_strided_slice %7 {offsets = [0, 16], sizes = [16, 8], strides = [1, 1]} : vector<16x32xf32> to vector<16x8xf32>
    %56 = vector.extract_strided_slice %15 {offsets = [16, 0], sizes = [8, 16], strides = [1, 1]} : vector<32x16xf32> to vector<8x16xf32>
    %57 = vector.extract_strided_slice %14 {offsets = [0, 16], sizes = [16, 8], strides = [1, 1]} : vector<16x32xf32> to vector<16x8xf32>
    %cst_28 = arith.constant dense<0.000000e+00> : vector<16x16xf32>
    %58 = tpu.matmul %55, %56, %cst_28 {dimension_numbers = #tpu.dot_dimension_numbers<[1], [0], [0], [1], [0, 0, 1, 1], [], []>} : vector<16x8xf32>, vector<8x16xf32>, vector<16x16xf32> -> vector<16x16xf32>
    %59 = arith.addf %58, %2 : vector<16x16xf32>
    %cst_29 = arith.constant dense<0xFF800000> : vector<16xf32>
    %60 = vector.multi_reduction <maximumf>, %59, %cst_29 [1] : vector<16x16xf32> to vector<16xf32>
    %61 = vector.shape_cast %60 : vector<16xf32> to vector<16x1xf32>
    %62 = vector.broadcast %61 : vector<16x1xf32> to vector<16x16xf32>
    %63 = arith.subf %59, %62 : vector<16x16xf32>
    %64 = math.exp %63 : vector<16x16xf32>
    %cst_30 = arith.constant dense<0.000000e+00> : vector<16xf32>
    %65 = vector.multi_reduction <add>, %64, %cst_30 [1] : vector<16x16xf32> to vector<16xf32>
    %66 = vector.shape_cast %65 : vector<16xf32> to vector<16x1xf32>
    %67 = tpu.reciprocal %66 {approx = true} : vector<16x1xf32> -> vector<16x1xf32>
    %68 = vector.broadcast %67 : vector<16x1xf32> to vector<16x16xf32>
    %69 = arith.mulf %64, %68 : vector<16x16xf32>
    %cst_31 = arith.constant dense<0.000000e+00> : vector<16x8xf32>
    %70 = tpu.matmul %69, %57, %cst_31 {dimension_numbers = #tpu.dot_dimension_numbers<[1], [0], [0], [1], [0, 0, 1, 1], [], []>} : vector<16x16xf32>, vector<16x8xf32>, vector<16x8xf32> -> vector<16x8xf32>
    %c16 = arith.constant 16 : index
    %c0_32 = arith.constant 0 : index
    %71 = vector.load %arg7[%c16, %c0_32] : memref<32x32xf32, #tpu.memory_space<vmem>>, vector<8x32xf32>
    %cst_33 = arith.constant dense<0.000000e+00> : vector<16x32xf32>
    %72 = tpu.matmul %70, %71, %cst_33 {dimension_numbers = #tpu.dot_dimension_numbers<[1], [0], [0], [1], [0, 0, 1, 1], [], []>} : vector<16x8xf32>, vector<8x32xf32>, vector<16x32xf32> -> vector<16x32xf32>
    %73 = arith.addf %54, %72 : vector<16x32xf32>
    %74 = vector.extract_strided_slice %7 {offsets = [0, 24], sizes = [16, 8], strides = [1, 1]} : vector<16x32xf32> to vector<16x8xf32>
    %75 = vector.extract_strided_slice %15 {offsets = [24, 0], sizes = [8, 16], strides = [1, 1]} : vector<32x16xf32> to vector<8x16xf32>
    %76 = vector.extract_strided_slice %14 {offsets = [0, 24], sizes = [16, 8], strides = [1, 1]} : vector<16x32xf32> to vector<16x8xf32>
    %cst_34 = arith.constant dense<0.000000e+00> : vector<16x16xf32>
    %77 = tpu.matmul %74, %75, %cst_34 {dimension_numbers = #tpu.dot_dimension_numbers<[1], [0], [0], [1], [0, 0, 1, 1], [], []>} : vector<16x8xf32>, vector<8x16xf32>, vector<16x16xf32> -> vector<16x16xf32>
    %78 = arith.addf %77, %2 : vector<16x16xf32>
    %cst_35 = arith.constant dense<0xFF800000> : vector<16xf32>
    %79 = vector.multi_reduction <maximumf>, %78, %cst_35 [1] : vector<16x16xf32> to vector<16xf32>
    %80 = vector.shape_cast %79 : vector<16xf32> to vector<16x1xf32>
    %81 = vector.broadcast %80 : vector<16x1xf32> to vector<16x16xf32>
    %82 = arith.subf %78, %81 : vector<16x16xf32>
    %83 = math.exp %82 : vector<16x16xf32>
    %cst_36 = arith.constant dense<0.000000e+00> : vector<16xf32>
    %84 = vector.multi_reduction <add>, %83, %cst_36 [1] : vector<16x16xf32> to vector<16xf32>
    %85 = vector.shape_cast %84 : vector<16xf32> to vector<16x1xf32>
    %86 = tpu.reciprocal %85 {approx = true} : vector<16x1xf32> -> vector<16x1xf32>
    %87 = vector.broadcast %86 : vector<16x1xf32> to vector<16x16xf32>
    %88 = arith.mulf %83, %87 : vector<16x16xf32>
    %cst_37 = arith.constant dense<0.000000e+00> : vector<16x8xf32>
    %89 = tpu.matmul %88, %76, %cst_37 {dimension_numbers = #tpu.dot_dimension_numbers<[1], [0], [0], [1], [0, 0, 1, 1], [], []>} : vector<16x16xf32>, vector<16x8xf32>, vector<16x8xf32> -> vector<16x8xf32>
    %c24 = arith.constant 24 : index
    %c0_38 = arith.constant 0 : index
    %90 = vector.load %arg7[%c24, %c0_38] : memref<32x32xf32, #tpu.memory_space<vmem>>, vector<8x32xf32>
    %cst_39 = arith.constant dense<0.000000e+00> : vector<16x32xf32>
    %91 = tpu.matmul %89, %90, %cst_39 {dimension_numbers = #tpu.dot_dimension_numbers<[1], [0], [0], [1], [0, 0, 1, 1], [], []>} : vector<16x8xf32>, vector<8x32xf32>, vector<16x32xf32> -> vector<16x32xf32>
    %92 = arith.addf %73, %91 : vector<16x32xf32>
    %c0_40 = arith.constant 0 : index
    %c0_41 = arith.constant 0 : index
    %93 = vector.load %arg8[%c0_40, %c0_41] : memref<1x32xf32, #tpu.memory_space<vmem>>, vector<1x32xf32>
    %94 = vector.broadcast %93 : vector<1x32xf32> to vector<16x32xf32>
    %95 = arith.addf %92, %94 : vector<16x32xf32>
    %96 = arith.addf %95, %0 : vector<16x32xf32>
    %cst_42 = arith.constant dense<0.000000e+00> : vector<16xf32>
    %97 = vector.multi_reduction <add>, %96, %cst_42 [1] : vector<16x32xf32> to vector<16xf32>
    %98 = vector.shape_cast %97 : vector<16xf32> to vector<16x1xf32>
    %cst_43 = arith.constant 3.200000e+01 : f32
    %99 = vector.broadcast %cst_43 : f32 to vector<16x1xf32>
    %100 = arith.divf %98, %99 : vector<16x1xf32>
    %101 = vector.broadcast %100 : vector<16x1xf32> to vector<16x32xf32>
    %102 = arith.subf %96, %101 : vector<16x32xf32>
    %103 = arith.mulf %102, %102 : vector<16x32xf32>
    %cst_44 = arith.constant dense<0.000000e+00> : vector<16xf32>
    %104 = vector.multi_reduction <add>, %103, %cst_44 [1] : vector<16x32xf32> to vector<16xf32>
    %105 = vector.shape_cast %104 : vector<16xf32> to vector<16x1xf32>
    %cst_45 = arith.constant 3.200000e+01 : f32
    %106 = vector.broadcast %cst_45 : f32 to vector<16x1xf32>
    %107 = arith.divf %105, %106 : vector<16x1xf32>
    %108 = vector.broadcast %100 : vector<16x1xf32> to vector<16x32xf32>
    %109 = arith.subf %96, %108 : vector<16x32xf32>
    %cst_46 = arith.constant 9.99999974E-6 : f32
    %110 = vector.broadcast %cst_46 : f32 to vector<16x1xf32>
    %111 = arith.addf %107, %110 : vector<16x1xf32>
    %112 = math.rsqrt %111 : vector<16x1xf32>
    %113 = vector.broadcast %112 : vector<16x1xf32> to vector<16x32xf32>
    %114 = arith.mulf %109, %113 : vector<16x32xf32>
    %c0_47 = arith.constant 0 : index
    %c0_48 = arith.constant 0 : index
    %115 = vector.load %arg9[%c0_47, %c0_48] : memref<1x32xf32, #tpu.memory_space<vmem>>, vector<1x32xf32>
    %116 = vector.broadcast %115 : vector<1x32xf32> to vector<16x32xf32>
    %117 = arith.mulf %114, %116 : vector<16x32xf32>
    %c0_49 = arith.constant 0 : index
    %c0_50 = arith.constant 0 : index
    %118 = vector.load %arg10[%c0_49, %c0_50] : memref<1x32xf32, #tpu.memory_space<vmem>>, vector<1x32xf32>
    %119 = vector.broadcast %118 : vector<1x32xf32> to vector<16x32xf32>
    %120 = arith.addf %117, %119 : vector<16x32xf32>
    %c0_51 = arith.constant 0 : index
    %c0_52 = arith.constant 0 : index
    %121 = vector.load %arg11[%c0_51, %c0_52] : memref<16x32xf32, #tpu.memory_space<vmem>>, vector<16x32xf32>
    tpu.vector_store %arg11[%c0_51, %c0_52], %120 {strides = array<i32>} : memref<16x32xf32, #tpu.memory_space<vmem>>, vector<16x32xf32>,
    return
  }
}

</mosaic_0001>

<llo_original>
// kernel: tpu_custom_call.1
$region0: #{tpu_custom_call.1}
  #allocation0 [shape = 'u32[]', space=smem, size = 0x4, offset = 0x4, fixed_abs, tag = 'smem constant byte address 0x4 - core index']
  #allocation1 [shape = 'u32[144,128]{1,0:T(1,128)}', space=vmem, size = 0x12000, scoped, tag = 'internal scratch']
  %s0 = inlined_call_operand.vmem [shape: f32[16,32], index: 0, kind: input, shape index: {}]
  %s1 = inlined_call_operand.vmem [shape: bf16[16,756], index: 1, kind: input, shape index: {}]
  %s2 = inlined_call_operand.vmem [shape: f32[16,16], index: 2, kind: input, shape index: {}]
  %s3 = inlined_call_operand.vmem [shape: f32[32,32], index: 3, kind: input, shape index: {}]
  %s4 = inlined_call_operand.vmem [shape: f32[1,32], index: 4, kind: input, shape index: {}]
  %s5 = inlined_call_operand.vmem [shape: bf16[756,64], index: 5, kind: input, shape index: {}]
  %s6 = inlined_call_operand.vmem [shape: f32[1,64], index: 6, kind: input, shape index: {}]
  %s7 = inlined_call_operand.vmem [shape: f32[32,32], index: 7, kind: input, shape index: {}]
  %s8 = inlined_call_operand.vmem [shape: f32[1,32], index: 8, kind: input, shape index: {}]
  %s9 = inlined_call_operand.vmem [shape: f32[1,32], index: 9, kind: input, shape index: {}]
  %s10 = inlined_call_operand.vmem [shape: f32[1,32], index: 10, kind: input, shape index: {}]
  %s11 = inlined_call_operand.hbm [shape: f32[16,32], index: 11, kind: output, shape index: {}]
  %s12 = sld [smem:[#allocation0]]
  $region54: #{tpu_custom_call.1} parent=0
    _
  %s14 = ssub.s32 1, %s12
  %s15 = scalar_select 0, %s14, %s12
  $region1: #{tpu_custom_call.1} parent=0
    #allocation2 [shape = 'u8[8192]{0}', space=vmem, size = 0x2000, scoped, tag = 'output window, operand 0, single buffered']
    #allocation3 [shape = 's32[1]{0}', space=sflag, size = 0x4, scoped, tag = 'scoped memory for tpu_custom_call.1']
    %16 = vsyncpa [#allocation3], 0
    // Predicated region
    $region2: #{tpu_custom_call.1} parent=1 // pred_check
      _
    $region3: #{tpu_custom_call.1} parent=1 // pred_check_branch
      %18 = sbr.rel (0) target = $region5
    $region4: #{tpu_custom_call.1} parent=1 // pred_region
      _
    $region5: #{tpu_custom_call.1} parent=1 // pred_fallthru
      _
    // Predicated region
    $region6: #{tpu_custom_call.1} parent=1 // pred_check
      _
    $region7: #{tpu_custom_call.1} parent=1 // pred_check_branch
      %20 = sbr.rel (0) target = $region9
    $region8: #{tpu_custom_call.1} parent=1 // pred_region
      _
    $region9: #{tpu_custom_call.1} parent=1 // pred_fallthru
      _
    // Predicated region
    $region10: #{tpu_custom_call.1} parent=1 // pred_check
      _
    $region11: #{tpu_custom_call.1} parent=1 // pred_check_branch
      %22 = sbr.rel (0) target = $region13
    $region12: #{tpu_custom_call.1} parent=1 // pred_region
      _
    $region13: #{tpu_custom_call.1} parent=1 // pred_fallthru
      _
    // Predicated region
    $region14: #{tpu_custom_call.1} parent=1 // pred_check
      _
    $region15: #{tpu_custom_call.1} parent=1 // pred_check_branch
      %24 = sbr.rel (0) target = $region17
    $region16: #{tpu_custom_call.1} parent=1 // pred_region
      _
    $region17: #{tpu_custom_call.1} parent=1 // pred_fallthru
      _
    // Predicated region
    $region18: #{tpu_custom_call.1} parent=1 // pred_check
      _
    $region19: #{tpu_custom_call.1} parent=1 // pred_check_branch
      %26 = sbr.rel (0) target = $region21
    $region20: #{tpu_custom_call.1} parent=1 // pred_region
      _
    $region21: #{tpu_custom_call.1} parent=1 // pred_fallthru
      _
    // Predicated region
    $region22: #{tpu_custom_call.1} parent=1 // pred_check
      _
    $region23: #{tpu_custom_call.1} parent=1 // pred_check_branch
      %28 = sbr.rel (0) target = $region25
    $region24: #{tpu_custom_call.1} parent=1 // pred_region
      _
    $region25: #{tpu_custom_call.1} parent=1 // pred_fallthru
      _
    // Predicated region
    $region26: #{tpu_custom_call.1} parent=1 // pred_check
      _
    $region27: #{tpu_custom_call.1} parent=1 // pred_check_branch
      %30 = sbr.rel (0) target = $region29
    $region28: #{tpu_custom_call.1} parent=1 // pred_region
      _
    $region29: #{tpu_custom_call.1} parent=1 // pred_fallthru
      _
    // Predicated region
    $region30: #{tpu_custom_call.1} parent=1 // pred_check
      _
    $region31: #{tpu_custom_call.1} parent=1 // pred_check_branch
      %32 = sbr.rel (0) target = $region33
    $region32: #{tpu_custom_call.1} parent=1 // pred_region
      _
    $region33: #{tpu_custom_call.1} parent=1 // pred_fallthru
      _
    // Predicated region
    $region34: #{tpu_custom_call.1} parent=1 // pred_check
      _
    $region35: #{tpu_custom_call.1} parent=1 // pred_check_branch
      %34 = sbr.rel (0) target = $region37
    $region36: #{tpu_custom_call.1} parent=1 // pred_region
      _
    $region37: #{tpu_custom_call.1} parent=1 // pred_fallthru
      _
    // Predicated region
    $region38: #{tpu_custom_call.1} parent=1 // pred_check
      _
    $region39: #{tpu_custom_call.1} parent=1 // pred_check_branch
      %36 = sbr.rel (0) target = $region41
    $region40: #{tpu_custom_call.1} parent=1 // pred_region
      _
    $region41: #{tpu_custom_call.1} parent=1 // pred_fallthru
      _
    // Predicated region
    $region42: #{tpu_custom_call.1} parent=1 // pred_check
      _
    $region43: #{tpu_custom_call.1} parent=1 // pred_check_branch
      %38 = sbr.rel (0) target = $region45
    $region44: #{tpu_custom_call.1} parent=1 // pred_region
      _
    $region45: #{tpu_custom_call.1} parent=1 // pred_fallthru
      _
    %v40 = vld [vmem:[%s0] sm:$0xff]
    %v41 = vld [vmem:[%s0 + $0x8] sm:$0xff]
    %v42 = vld [vmem:[%s1] sm:$0xff]
    %v43 = vld [vmem:[%s1 + $0x8] sm:$0xff]
    %v44 = vld [vmem:[%s1 + $0x10] sm:$0xff]
    %v45 = vld [vmem:[%s1 + $0x18] sm:$0xff]
    %v46 = vld [vmem:[%s1 + $0x20] sm:$0xff]
    %v47 = vld [vmem:[%s1 + $0x28] sm:$0xff]
    %v48 = vld [vmem:[%s2] sm:$0xff]
    %v49 = vld [vmem:[%s2 + $0x8] sm:$0xff]
    %v50 = vld [vmem:[%s3] sm:$0xff]
    %v51 = vld [vmem:[%s3 + $0x8] sm:$0xff]
    %v52 = vld [vmem:[%s3 + $0x10] sm:$0xff]
    %v53 = vld [vmem:[%s3 + $0x18] sm:$0xff]
    %v54 = vld [vmem:[%s4] sm:$0x1]
    %v56 = vlaneseq
    %v57 = vshrl.u32 %v56, 7
    %v58 = vsub.s32 0, %v57
    %v59 = vrot.slane %v54, %v58
    %vm61 = vcmask 261120
    %v63 = vsel %vm61, %v40, 0
    %v66 = vsel %vm61, %v41, 0
    %68 = vmatprep.subr.mxu0 0.0
    %69 = vmatpush1.msra.mxu0 %v50
    %70 = vmatprep.subr.mxu0 0.0
    %71 = vmatpush1.msra.mxu0 %v51
    %72 = vmatprep.subr.mxu0 0.0
    %73 = vmatpush1.msra.mxu0 %v52
    %74 = vmatprep.subr.mxu0 0.0
    %75 = vmatpush1.msra.mxu0 %v53
    %76 = vmatprep.subr.mxu0 0.0
    %77 = vmatpush1.msra.mxu0 0.0
    %78 = vmatprep.subr.mxu0 0.0
    %79 = vmatpush1.msra.mxu0 0.0
    %80 = vmatprep.subr.mxu0 0.0
    %81 = vmatpush1.msra.mxu0 0.0
    %82 = vmatprep.subr.mxu0 0.0
    %83 = vmatpush1.msra.mxu0 0.0
    %84 = vmatprep.subr.mxu0 0.0
    %85 = vmatpush1.msra.mxu0 0.0
    %86 = vmatprep.subr.mxu0 0.0
    %87 = vmatpush1.msra.mxu0 0.0
    %88 = vmatprep.subr.mxu0 0.0
    %89 = vmatpush1.msra.mxu0 0.0
    %90 = vmatprep.subr.mxu0 0.0
    %91 = vmatpush1.msra.mxu0 0.0
    %92 = vmatprep.subr.mxu0 0.0
    %93 = vmatpush1.msra.mxu0 0.0
    %94 = vmatprep.subr.mxu0 0.0
    %95 = vmatpush1.msra.mxu0 0.0
    %96 = vmatprep.subr.mxu0 0.0
    %97 = vmatpush1.msra.mxu0 0.0
    %98 = vmatprep.subr.mxu0 0.0
    %99 = vmatpush1.msra.mxu0 0.0
    %100 = vmatprep.subr.mxu0 0.0
    %101 = vmatpush1.msra.mxu0 0.0
    %102 = vmatprep.subr.mxu0 0.0
    %103 = vmatpush1.msra.mxu0 0.0
    %104 = vmatprep.subr.mxu0 0.0
    %105 = vmatpush1.msra.mxu0 0.0
    %106 = vmatprep.subr.mxu0 0.0
    %107 = vmatpush1.msra.mxu0 0.0
    %108 = vmatprep.subr.mxu0 0.0
    %109 = vmatpush1.msra.mxu0 0.0
    %110 = vmatprep.subr.mxu0 0.0
    %111 = vmatpush1.msra.mxu0 0.0
    %112 = vmatprep.subr.mxu0 0.0
    %113 = vmatpush1.msra.mxu0 0.0
    %114 = vmatprep.subr.mxu0 0.0
    %115 = vmatpush1.msra.mxu0 0.0
    %116 = vmatprep.subr.mxu0 0.0
    %117 = vmatpush1.msra.mxu0 0.0
    %118 = vmatprep.subr.mxu0 0.0
    %119 = vmatpush1.msra.mxu0 0.0
    %120 = vmatprep.subr.mxu0 0.0
    %121 = vmatpush1.msra.mxu0 0.0
    %122 = vmatprep.subr.mxu0 0.0
    %123 = vmatpush1.msra.mxu0 0.0
    %124 = vmatprep.subr.mxu0 0.0
    %125 = vmatpush1.msra.mxu0 0.0
    %126 = vmatprep.subr.mxu0 0.0
    %127 = vmatpush1.msra.mxu0 0.0
    %128 = vmatprep.subr.mxu0 0.0
    %129 = vmatpush1.msra.mxu0 0.0
    %130 = vmatprep.subr.mxu0 0.0
    %131 = vmatpush1.msra.mxu0 0.0
    %132 = vmatprep.mubr.f32.mxu0 0.0
    %133 = vmatmul.mubr.f32.gmra.mrb[0].mxu0 %v63
    %v134 = vpop.f32.mrb[0].mxu0
    %v135 = vadd.f32 %v59, %v134
    %v136 = vpop.f32.mrb[0].mxu0
    %137 = vmatprep.mubr.f32.mxu0 0.0
    %138 = vmatmul.mubr.f32.gmra.mrb[0].mxu0 %v66
    %v139 = vpop.f32.mrb[0].mxu0
    %v140 = vadd.f32 %v59, %v139
    %v141 = vpop.f32.mrb[0].mxu0
    %142 = vdwg.mxu0
    %v143 = vld [vmem:[%s5] sm:$0xf]
    %v144 = vld [vmem:[%s5 + $0x4] sm:$0xf]
    %v145 = vld [vmem:[%s5 + $0x8] sm:$0xf]
    %v146 = vld [vmem:[%s5 + $0xc] sm:$0xf]
    %v147 = vld [vmem:[%s5 + $0x10] sm:$0xf]
    %v148 = vld [vmem:[%s5 + $0x14] sm:$0xf]
    %v149 = vld [vmem:[%s5 + $0x18] sm:$0xf]
    %v150 = vld [vmem:[%s5 + $0x1c] sm:$0xf]
    %v151 = vld [vmem:[%s5 + $0x20] sm:$0xf]
    %v152 = vld [vmem:[%s5 + $0x24] sm:$0xf]
    %v153 = vld [vmem:[%s5 + $0x28] sm:$0xf]
    %v154 = vld [vmem:[%s5 + $0x2c] sm:$0xf]
    %v155 = vld [vmem:[%s5 + $0x30] sm:$0xf]
    %v156 = vld [vmem:[%s5 + $0x34] sm:$0xf]
    %v157 = vld [vmem:[%s5 + $0x38] sm:$0xf]
    %v158 = vld [vmem:[%s5 + $0x3c] sm:$0xf]
    %v159 = vld [vmem:[%s5 + $0x40] sm:$0xf]
    %v160 = vld [vmem:[%s5 + $0x44] sm:$0xf]
    %v161 = vld [vmem:[%s5 + $0x48] sm:$0xf]
    %v162 = vld [vmem:[%s5 + $0x4c] sm:$0xf]
    %v163 = vld [vmem:[%s5 + $0x50] sm:$0xf]
    %v164 = vld [vmem:[%s5 + $0x54] sm:$0xf]
    %v165 = vld [vmem:[%s5 + $0x58] sm:$0xf]
    %v166 = vld [vmem:[%s5 + $0x5c] sm:$0xf]
    %v167 = vld [vmem:[%s5 + $0x60] sm:$0xf]
    %v168 = vld [vmem:[%s5 + $0x64] sm:$0xf]
    %v169 = vld [vmem:[%s5 + $0x68] sm:$0xf]
    %v170 = vld [vmem:[%s5 + $0x6c] sm:$0xf]
    %v171 = vld [vmem:[%s5 + $0x70] sm:$0xf]
    %v172 = vld [vmem:[%s5 + $0x74] sm:$0xf]
    %v173 = vld [vmem:[%s5 + $0x78] sm:$0xf]
    %v174 = vld [vmem:[%s5 + $0x7c] sm:$0xf]
    %v175 = vld [vmem:[%s5 + $0x80] sm:$0xf]
    %v176 = vld [vmem:[%s5 + $0x84] sm:$0xf]
    %v177 = vld [vmem:[%s5 + $0x88] sm:$0xf]
    %v178 = vld [vmem:[%s5 + $0x8c] sm:$0xf]
    %v179 = vld [vmem:[%s5 + $0x90] sm:$0xf]
    %v180 = vld [vmem:[%s5 + $0x94] sm:$0xf]
    %v181 = vld [vmem:[%s5 + $0x98] sm:$0xf]
    %v182 = vld [vmem:[%s5 + $0x9c] sm:$0xf]
    %v183 = vld [vmem:[%s5 + $0xa0] sm:$0xf]
    %v184 = vld [vmem:[%s5 + $0xa4] sm:$0xf]
    %v185 = vld [vmem:[%s5 + $0xa8] sm:$0xf]
    %v186 = vld [vmem:[%s5 + $0xac] sm:$0xf]
    %v187 = vld [vmem:[%s5 + $0xb0] sm:$0xf]
    %v188 = vld [vmem:[%s5 + $0xb4] sm:$0xf]
    %v189 = vld [vmem:[%s5 + $0xb8] sm:$0xf]
    %v190 = vld [vmem:[%s5 + $0xbc] sm:$0xf]
    %v191 = vld [vmem:[%s5 + $0xc0] sm:$0xf]
    %v192 = vld [vmem:[%s5 + $0xc4] sm:$0xf]
    %v193 = vld [vmem:[%s5 + $0xc8] sm:$0xf]
    %v194 = vld [vmem:[%s5 + $0xcc] sm:$0xf]
    %v195 = vld [vmem:[%s5 + $0xd0] sm:$0xf]
    %v196 = vld [vmem:[%s5 + $0xd4] sm:$0xf]
    %v197 = vld [vmem:[%s5 + $0xd8] sm:$0xf]
    %v198 = vld [vmem:[%s5 + $0xdc] sm:$0xf]
    %v199 = vld [vmem:[%s5 + $0xe0] sm:$0xf]
    %v200 = vld [vmem:[%s5 + $0xe4] sm:$0xf]
    %v201 = vld [vmem:[%s5 + $0xe8] sm:$0xf]
    %v202 = vld [vmem:[%s5 + $0xec] sm:$0xf]
    %v203 = vld [vmem:[%s5 + $0xf0] sm:$0xf]
    %v204 = vld [vmem:[%s5 + $0xf4] sm:$0xf]
    %v205 = vld [vmem:[%s5 + $0xf8] sm:$0xf]
    %v206 = vld [vmem:[%s5 + $0xfc] sm:$0xf]
    %v207 = vld [vmem:[%s5 + $0x100] sm:$0xf]
    %v208 = vld [vmem:[%s5 + $0x104] sm:$0xf]
    %v209 = vld [vmem:[%s5 + $0x108] sm:$0xf]
    %v210 = vld [vmem:[%s5 + $0x10c] sm:$0xf]
    %v211 = vld [vmem:[%s5 + $0x110] sm:$0xf]
    %v212 = vld [vmem:[%s5 + $0x114] sm:$0xf]
    %v213 = vld [vmem:[%s5 + $0x118] sm:$0xf]
    %v214 = vld [vmem:[%s5 + $0x11c] sm:$0xf]
    %v215 = vld [vmem:[%s5 + $0x120] sm:$0xf]
    %v216 = vld [vmem:[%s5 + $0x124] sm:$0xf]
    %v217 = vld [vmem:[%s5 + $0x128] sm:$0xf]
    %v218 = vld [vmem:[%s5 + $0x12c] sm:$0xf]
    %v219 = vld [vmem:[%s5 + $0x130] sm:$0xf]
    %v220 = vld [vmem:[%s5 + $0x134] sm:$0xf]
    %v221 = vld [vmem:[%s5 + $0x138] sm:$0xf]
    %v222 = vld [vmem:[%s5 + $0x13c] sm:$0xf]
    %v223 = vld [vmem:[%s5 + $0x140] sm:$0xf]
    %v224 = vld [vmem:[%s5 + $0x144] sm:$0xf]
    %v225 = vld [vmem:[%s5 + $0x148] sm:$0xf]
    %v226 = vld [vmem:[%s5 + $0x14c] sm:$0xf]
    %v227 = vld [vmem:[%s5 + $0x150] sm:$0xf]
    %v228 = vld [vmem:[%s5 + $0x154] sm:$0xf]
    %v229 = vld [vmem:[%s5 + $0x158] sm:$0xf]
    %v230 = vld [vmem:[%s5 + $0x15c] sm:$0xf]
    %v231 = vld [vmem:[%s5 + $0x160] sm:$0xf]
    %v232 = vld [vmem:[%s5 + $0x164] sm:$0xf]
    %v233 = vld [vmem:[%s5 + $0x168] sm:$0xf]
    %v234 = vld [vmem:[%s5 + $0x16c] sm:$0xf]
    %v235 = vld [vmem:[%s5 + $0x170] sm:$0xf]
    %v236 = vld [vmem:[%s5 + $0x174] sm:$0xf]
    %v237 = vld [vmem:[%s5 + $0x178] sm:$0x3]
    %v238 = vld [vmem:[%s6] sm:$0x1]
    %v240 = vlaneseq
    %v241 = vshrl.u32 %v240, 7
    %v242 = vsub.s32 0, %v241
    %v243 = vrot.slane %v238, %v242
    %v251 = vunpack.c.l.b16 %v42
    %v252 = vunpack.c.h.b16 %v42
    %v253 = vunpack.c.l.b16 %v43
    %v254 = vunpack.c.h.b16 %v43
    %v255 = vunpack.c.l.b16 %v44
    %v256 = vunpack.c.h.b16 %v44
    %v257 = vunpack.c.l.b16 %v45
    %v258 = vunpack.c.h.b16 %v45
    %v259 = vunpack.c.l.b16 %v46
    %v260 = vunpack.c.h.b16 %v46
    %v261 = vunpack.c.l.b16 %v47
    %v262 = vunpack.c.h.b16 %v47
    %v263 = vpack.c.b16 %v257, %v251
    %v264 = vpack.c.b16 %v258, %v252
    %v265 = vpack.c.b16 %v259, %v253
    %v266 = vpack.c.b16 %v260, %v254
    %v267 = vpack.c.b16 %v261, %v255
    %v268 = vpack.c.b16 %v262, %v256
    %v369 = vunpack.c.l.b16 %v143
    %v370 = vunpack.c.l.b16 %v144
    %v371 = vunpack.c.l.b16 %v145
    %v372 = vunpack.c.l.b16 %v146
    %v373 = vunpack.c.l.b16 %v147
    %v374 = vunpack.c.l.b16 %v148
    %v375 = vunpack.c.l.b16 %v149
    %v376 = vunpack.c.l.b16 %v150
    %v377 = vunpack.c.l.b16 %v151
    %v378 = vunpack.c.l.b16 %v152
    %v379 = vunpack.c.l.b16 %v153
    %v380 = vunpack.c.l.b16 %v154
    %v381 = vunpack.c.l.b16 %v155
    %v382 = vunpack.c.l.b16 %v156
    %v383 = vunpack.c.l.b16 %v157
    %v384 = vunpack.c.l.b16 %v158
    %v385 = vunpack.c.l.b16 %v159
    %v386 = vunpack.c.l.b16 %v160
    %v387 = vunpack.c.l.b16 %v161
    %v388 = vunpack.c.l.b16 %v162
    %v389 = vunpack.c.l.b16 %v163
    %v390 = vunpack.c.l.b16 %v164
    %v391 = vunpack.c.l.b16 %v165
    %v392 = vunpack.c.l.b16 %v166
    %v393 = vunpack.c.l.b16 %v167
    %v394 = vunpack.c.l.b16 %v168
    %v395 = vunpack.c.l.b16 %v169
    %v396 = vunpack.c.l.b16 %v170
    %v397 = vunpack.c.l.b16 %v171
    %v398 = vunpack.c.l.b16 %v172
    %v399 = vunpack.c.l.b16 %v173
    %v400 = vunpack.c.l.b16 %v174
    %v401 = vunpack.c.l.b16 %v175
    %v402 = vunpack.c.l.b16 %v176
    %v403 = vunpack.c.l.b16 %v177
    %v404 = vunpack.c.l.b16 %v178
    %v405 = vunpack.c.l.b16 %v179
    %v406 = vunpack.c.l.b16 %v180
    %v407 = vunpack.c.l.b16 %v181
    %v408 = vunpack.c.l.b16 %v182
    %v409 = vunpack.c.l.b16 %v183
    %v410 = vunpack.c.l.b16 %v184
    %v411 = vunpack.c.l.b16 %v185
    %v412 = vunpack.c.l.b16 %v186
    %v413 = vunpack.c.l.b16 %v187
    %v414 = vunpack.c.l.b16 %v188
    %v415 = vunpack.c.l.b16 %v189
    %v416 = vunpack.c.l.b16 %v190
    %v417 = vunpack.c.l.b16 %v191
    %v418 = vunpack.c.l.b16 %v192
    %v419 = vunpack.c.l.b16 %v193
    %v420 = vunpack.c.l.b16 %v194
    %v421 = vunpack.c.l.b16 %v195
    %v422 = vunpack.c.l.b16 %v196
    %v423 = vunpack.c.l.b16 %v197
    %v424 = vunpack.c.l.b16 %v198
    %v425 = vunpack.c.l.b16 %v199
    %v426 = vunpack.c.l.b16 %v200
    %v427 = vunpack.c.l.b16 %v201
    %v428 = vunpack.c.l.b16 %v202
    %v429 = vunpack.c.l.b16 %v203
    %v430 = vunpack.c.l.b16 %v204
    %v431 = vunpack.c.l.b16 %v205
    %v432 = vunpack.c.l.b16 %v206
    %v433 = vunpack.c.l.b16 %v207
    %v434 = vunpack.c.l.b16 %v208
    %v435 = vunpack.c.l.b16 %v209
    %v436 = vunpack.c.l.b16 %v210
    %v437 = vunpack.c.l.b16 %v211
    %v438 = vunpack.c.l.b16 %v212
    %v439 = vunpack.c.l.b16 %v213
    %v440 = vunpack.c.l.b16 %v214
    %v441 = vunpack.c.l.b16 %v215
    %v442 = vunpack.c.l.b16 %v216
    %v443 = vunpack.c.l.b16 %v217
    %v444 = vunpack.c.l.b16 %v218
    %v445 = vunpack.c.l.b16 %v219
    %v446 = vunpack.c.l.b16 %v220
    %v447 = vunpack.c.l.b16 %v221
    %v448 = vunpack.c.l.b16 %v222
    %v449 = vunpack.c.l.b16 %v223
    %v450 = vunpack.c.l.b16 %v224
    %v451 = vunpack.c.l.b16 %v225
    %v452 = vunpack.c.l.b16 %v226
    %v453 = vunpack.c.l.b16 %v227
    %v454 = vunpack.c.l.b16 %v228
    %v455 = vunpack.c.l.b16 %v229
    %v456 = vunpack.c.l.b16 %v230
    %v457 = vunpack.c.l.b16 %v231
    %v458 = vunpack.c.l.b16 %v232
    %v459 = vunpack.c.l.b16 %v233
    %v460 = vunpack.c.l.b16 %v234
    %v461 = vunpack.c.l.b16 %v235
    %v462 = vunpack.c.l.b16 %v236
    %v463 = vunpack.c.l.b16 %v237
    %v464 = vpack.c.b16 %v370, %v369
    %v465 = vpack.c.b16 %v372, %v371
    %v466 = vpack.c.b16 %v374, %v373
    %v467 = vpack.c.b16 %v376, %v375
    %v468 = vpack.c.b16 %v378, %v377
    %v469 = vpack.c.b16 %v380, %v379
    %v470 = vpack.c.b16 %v382, %v381
    %v471 = vpack.c.b16 %v384, %v383
    %v472 = vpack.c.b16 %v386, %v385
    %v473 = vpack.c.b16 %v388, %v387
    %v474 = vpack.c.b16 %v390, %v389
    %v475 = vpack.c.b16 %v392, %v391
    %v476 = vpack.c.b16 %v394, %v393
    %v477 = vpack.c.b16 %v396, %v395
    %v478 = vpack.c.b16 %v398, %v397
    %v479 = vpack.c.b16 %v400, %v399
    %v480 = vpack.c.b16 %v402, %v401
    %v481 = vpack.c.b16 %v404, %v403
    %v482 = vpack.c.b16 %v406, %v405
    %v483 = vpack.c.b16 %v408, %v407
    %v484 = vpack.c.b16 %v410, %v409
    %v485 = vpack.c.b16 %v412, %v411
    %v486 = vpack.c.b16 %v414, %v413
    %v487 = vpack.c.b16 %v416, %v415
    %v488 = vpack.c.b16 %v418, %v417
    %v489 = vpack.c.b16 %v420, %v419
    %v490 = vpack.c.b16 %v422, %v421
    %v491 = vpack.c.b16 %v424, %v423
    %v492 = vpack.c.b16 %v426, %v425
    %v493 = vpack.c.b16 %v428, %v427
    %v494 = vpack.c.b16 %v430, %v429
    %v495 = vpack.c.b16 %v432, %v431
    %v496 = vpack.c.b16 %v434, %v433
    %v497 = vpack.c.b16 %v436, %v435
    %v498 = vpack.c.b16 %v438, %v437
    %v499 = vpack.c.b16 %v440, %v439
    %v500 = vpack.c.b16 %v442, %v441
    %v501 = vpack.c.b16 %v444, %v443
    %v502 = vpack.c.b16 %v446, %v445
    %v503 = vpack.c.b16 %v448, %v447
    %v504 = vpack.c.b16 %v450, %v449
    %v505 = vpack.c.b16 %v452, %v451
    %v506 = vpack.c.b16 %v454, %v453
    %v507 = vpack.c.b16 %v456, %v455
    %v508 = vpack.c.b16 %v458, %v457
    %v509 = vpack.c.b16 %v460, %v459
    %v510 = vpack.c.b16 %v462, %v461
    %v511 = vpack.c.b16 %v463, %v463
    %vm559 = vcmask 949248
    %v561 = vsel %vm559, %v268, 0
    %vm563 = vcmask 1041408
    %v565 = vsel %vm563, %v511, 0
    %567 = vmatprep.subr.bf16.mxu0 0
    %568 = vmatpush1.bf16.msra.mxu0 %v464
    %569 = vmatprep.subr.bf16.mxu0 0
    %570 = vmatpush1.bf16.msra.mxu0 %v465
    %571 = vmatprep.subr.bf16.mxu0 0
    %572 = vmatpush1.bf16.msra.mxu0 %v466
    %573 = vmatprep.subr.bf16.mxu0 0
    %574 = vmatpush1.bf16.msra.mxu0 %v467
    %575 = vmatprep.subr.bf16.mxu0 0
    %576 = vmatpush1.bf16.msra.mxu0 %v468
    %577 = vmatprep.subr.bf16.mxu0 0
    %578 = vmatpush1.bf16.msra.mxu0 %v469
    %579 = vmatprep.subr.bf16.mxu0 0
    %580 = vmatpush1.bf16.msra.mxu0 %v470
    %581 = vmatprep.subr.bf16.mxu0 0
    %582 = vmatpush1.bf16.msra.mxu0 %v471
    %583 = vmatprep.subr.bf16.mxu0 0
    %584 = vmatpush1.bf16.msra.mxu0 %v472
    %585 = vmatprep.subr.bf16.mxu0 0
    %586 = vmatpush1.bf16.msra.mxu0 %v473
    %587 = vmatprep.subr.bf16.mxu0 0
    %588 = vmatpush1.bf16.msra.mxu0 %v474
    %589 = vmatprep.subr.bf16.mxu0 0
    %590 = vmatpush1.bf16.msra.mxu0 %v475
    %591 = vmatprep.subr.bf16.mxu0 0
    %592 = vmatpush1.bf16.msra.mxu0 %v476
    %593 = vmatprep.subr.bf16.mxu0 0
    %594 = vmatpush1.bf16.msra.mxu0 %v477
    %595 = vmatprep.subr.bf16.mxu0 0
    %596 = vmatpush1.bf16.msra.mxu0 %v478
    %597 = vmatprep.subr.bf16.mxu0 0
    %598 = vmatpush1.bf16.msra.mxu0 %v479
    %599 = vmatprep.mubr.bf16.mxu0 %v264
    %600 = vmatmul.mubr.bf16.gmra.mrb[0].mxu0 %v263
    %v601 = vpop.f32.mrb[0].mxu0
    %v602 = vadd.f32 %v243, %v601
    %v603 = vpop.f32.mrb[0].mxu0
    %v604 = vpop.f32.mrb[0].mxu0
    %v605 = vadd.f32 %v243, %v604
    %v606 = vpop.f32.mrb[0].mxu0
    %607 = vdwg.mxu0
    %608 = vmatprep.subr.bf16.mxu0 0
    %609 = vmatpush1.bf16.msra.mxu0 %v480
    %610 = vmatprep.subr.bf16.mxu0 0
    %611 = vmatpush1.bf16.msra.mxu0 %v481
    %612 = vmatprep.subr.bf16.mxu0 0
    %613 = vmatpush1.bf16.msra.mxu0 %v482
    %614 = vmatprep.subr.bf16.mxu0 0
    %615 = vmatpush1.bf16.msra.mxu0 %v483
    %616 = vmatprep.subr.bf16.mxu0 0
    %617 = vmatpush1.bf16.msra.mxu0 %v484
    %618 = vmatprep.subr.bf16.mxu0 0
    %619 = vmatpush1.bf16.msra.mxu0 %v485
    %620 = vmatprep.subr.bf16.mxu0 0
    %621 = vmatpush1.bf16.msra.mxu0 %v486
    %622 = vmatprep.subr.bf16.mxu0 0
    %623 = vmatpush1.bf16.msra.mxu0 %v487
    %624 = vmatprep.subr.bf16.mxu0 0
    %625 = vmatpush1.bf16.msra.mxu0 %v488
    %626 = vmatprep.subr.bf16.mxu0 0
    %627 = vmatpush1.bf16.msra.mxu0 %v489
    %628 = vmatprep.subr.bf16.mxu0 0
    %629 = vmatpush1.bf16.msra.mxu0 %v490
    %630 = vmatprep.subr.bf16.mxu0 0
    %631 = vmatpush1.bf16.msra.mxu0 %v491
    %632 = vmatprep.subr.bf16.mxu0 0
    %633 = vmatpush1.bf16.msra.mxu0 %v492
    %634 = vmatprep.subr.bf16.mxu0 0
    %635 = vmatpush1.bf16.msra.mxu0 %v493
    %636 = vmatprep.subr.bf16.mxu0 0
    %637 = vmatpush1.bf16.msra.mxu0 %v494
    %638 = vmatprep.subr.bf16.mxu0 0
    %639 = vmatpush1.bf16.msra.mxu0 %v495
    %640 = vmatprep.mubr.bf16.mxu0 %v266
    %641 = vmatmul.mubr.bf16.gmra.mrb[0].mxu0 %v265
    %v642 = vpop.f32.mrb[0].mxu0
    %v643 = vadd.f32 %v602, %v642
    %v644 = vpop.f32.mrb[0].mxu0
    %v645 = vpop.f32.mrb[0].mxu0
    %v646 = vadd.f32 %v605, %v645
    %v647 = vpop.f32.mrb[0].mxu0
    %648 = vdwg.mxu0
    %649 = vmatprep.subr.bf16.mxu0 0
    %650 = vmatpush1.bf16.msra.mxu0 %v496
    %651 = vmatprep.subr.bf16.mxu0 0
    %652 = vmatpush1.bf16.msra.mxu0 %v497
    %653 = vmatprep.subr.bf16.mxu0 0
    %654 = vmatpush1.bf16.msra.mxu0 %v498
    %655 = vmatprep.subr.bf16.mxu0 0
    %656 = vmatpush1.bf16.msra.mxu0 %v499
    %657 = vmatprep.subr.bf16.mxu0 0
    %658 = vmatpush1.bf16.msra.mxu0 %v500
    %659 = vmatprep.subr.bf16.mxu0 0
    %660 = vmatpush1.bf16.msra.mxu0 %v501
    %661 = vmatprep.subr.bf16.mxu0 0
    %662 = vmatpush1.bf16.msra.mxu0 %v502
    %663 = vmatprep.subr.bf16.mxu0 0
    %664 = vmatpush1.bf16.msra.mxu0 %v503
    %665 = vmatprep.subr.bf16.mxu0 0
    %666 = vmatpush1.bf16.msra.mxu0 %v504
    %667 = vmatprep.subr.bf16.mxu0 0
    %668 = vmatpush1.bf16.msra.mxu0 %v505
    %669 = vmatprep.subr.bf16.mxu0 0
    %670 = vmatpush1.bf16.msra.mxu0 %v506
    %671 = vmatprep.subr.bf16.mxu0 0
    %672 = vmatpush1.bf16.msra.mxu0 %v507
    %673 = vmatprep.subr.bf16.mxu0 0
    %674 = vmatpush1.bf16.msra.mxu0 %v508
    %675 = vmatprep.subr.bf16.mxu0 0
    %676 = vmatpush1.bf16.msra.mxu0 %v509
    %677 = vmatprep.subr.bf16.mxu0 0
    %678 = vmatpush1.bf16.msra.mxu0 %v510
    %679 = vmatprep.subr.bf16.mxu0 0
    %680 = vmatpush1.bf16.msra.mxu0 %v565
    %681 = vmatprep.mubr.bf16.mxu0 %v561
    %682 = vmatmul.mubr.bf16.gmra.mrb[0].mxu0 %v267
    %v683 = vpop.f32.mrb[0].mxu0
    %v684 = vadd.f32 %v643, %v683
    %v685 = vpop.f32.mrb[0].mxu0
    %v686 = vpop.f32.mrb[0].mxu0
    %v687 = vadd.f32 %v646, %v686
    %v688 = vpop.f32.mrb[0].mxu0
    %689 = vdwg.mxu0
    %vm690 = vcmask 64512
    %v692 = vsel %vm690, %v135, 0
    %v695 = vsel %vm690, %v140, 0
    %v698 = vsel %vm690, %v684, 0
    %v701 = vsel %vm690, %v687, 0
    %703 = vmatprep.subr.mxu0 0.0
    %704 = vmatpush1.xpose.msra.mxu0 %v698
    %705 = vmatprep.subr.mxu0 0.0
    %706 = vmatpush1.xpose.msra.mxu0 %v701
    %707 = vmatprep.subr.mxu0 0.0
    %708 = vmatpush1.xpose.msra.mxu0 0.0
    %709 = vmatprep.subr.mxu0 0.0
    %710 = vmatpush1.xpose.msra.mxu0 0.0
    %711 = vmatprep.subr.mxu0 0.0
    %712 = vmatpush1.xpose.msra.mxu0 0.0
    %713 = vmatprep.subr.mxu0 0.0
    %714 = vmatpush1.xpose.msra.mxu0 0.0
    %715 = vmatprep.subr.mxu0 0.0
    %716 = vmatpush1.xpose.msra.mxu0 0.0
    %717 = vmatprep.subr.mxu0 0.0
    %718 = vmatpush1.xpose.msra.mxu0 0.0
    %719 = vmatprep.subr.mxu0 0.0
    %720 = vmatpush1.xpose.msra.mxu0 0.0
    %721 = vmatprep.subr.mxu0 0.0
    %722 = vmatpush1.xpose.msra.mxu0 0.0
    %723 = vmatprep.subr.mxu0 0.0
    %724 = vmatpush1.xpose.msra.mxu0 0.0
    %725 = vmatprep.subr.mxu0 0.0
    %726 = vmatpush1.xpose.msra.mxu0 0.0
    %727 = vmatprep.subr.mxu0 0.0
    %728 = vmatpush1.xpose.msra.mxu0 0.0
    %729 = vmatprep.subr.mxu0 0.0
    %730 = vmatpush1.xpose.msra.mxu0 0.0
    %731 = vmatprep.subr.mxu0 0.0
    %732 = vmatpush1.xpose.msra.mxu0 0.0
    %733 = vmatprep.subr.mxu0 0.0
    %734 = vmatpush1.xpose.msra.mxu0 0.0
    %735 = vmatprep.subr.mxu0 0.0
    %736 = vmatpush1.xpose.msra.mxu0 0.0
    %737 = vmatprep.subr.mxu0 0.0
    %738 = vmatpush1.xpose.msra.mxu0 0.0
    %739 = vmatprep.subr.mxu0 0.0
    %740 = vmatpush1.xpose.msra.mxu0 0.0
    %741 = vmatprep.subr.mxu0 0.0
    %742 = vmatpush1.xpose.msra.mxu0 0.0
    %743 = vmatprep.subr.mxu0 0.0
    %744 = vmatpush1.xpose.msra.mxu0 0.0
    %745 = vmatprep.subr.mxu0 0.0
    %746 = vmatpush1.xpose.msra.mxu0 0.0
    %747 = vmatprep.subr.mxu0 0.0
    %748 = vmatpush1.xpose.msra.mxu0 0.0
    %749 = vmatprep.subr.mxu0 0.0
    %750 = vmatpush1.xpose.msra.mxu0 0.0
    %751 = vmatprep.subr.mxu0 0.0
    %752 = vmatpush1.xpose.msra.mxu0 0.0
    %753 = vmatprep.subr.mxu0 0.0
    %754 = vmatpush1.xpose.msra.mxu0 0.0
    %755 = vmatprep.subr.mxu0 0.0
    %756 = vmatpush1.xpose.msra.mxu0 0.0
    %757 = vmatprep.subr.mxu0 0.0
    %758 = vmatpush1.xpose.msra.mxu0 0.0
    %759 = vmatprep.subr.mxu0 0.0
    %760 = vmatpush1.xpose.msra.mxu0 0.0
    %761 = vmatprep.subr.mxu0 0.0
    %762 = vmatpush1.xpose.msra.mxu0 0.0
    %763 = vmatprep.subr.mxu0 0.0
    %764 = vmatpush1.xpose.msra.mxu0 0.0
    %765 = vmatprep.subr.mxu0 0.0
    %766 = vmatpush1.xpose.msra.mxu0 0.0
    %767 = vmatprep.mubr.f32.mxu0 0.0
    %768 = vmatmul.mubr.f32.gmra.mrb[0].mxu0 %v692
    %v769 = vpop.f32.mrb[0].mxu0
    %v770 = vadd.f32 %v48, %v769
    %v771 = vpop.f32.mrb[0].mxu0
    %772 = vmatprep.mubr.f32.mxu0 0.0
    %773 = vmatmul.mubr.f32.gmra.mrb[0].mxu0 %v695
    %v774 = vpop.f32.mrb[0].mxu0
    %v775 = vadd.f32 %v49, %v774
    %v776 = vpop.f32.mrb[0].mxu0
    %777 = vdwg.mxu0
    %vm778 = vcmask 130048
    %v779 = vsel %vm778, %v770, -inf
    %780 = vmax.xlane.f32.xlu0 %v779
    %v781 = vpop.xlane.xlu0 %780
    %v782 = vsel %vm778, %v775, -inf
    %783 = vmax.xlane.f32.xlu0 %v782
    %v784 = vpop.xlane.xlu0 %783
    %v785 = vsub.f32 %v770, %v781
    %v786 = vsub.f32 %v775, %v784
    %v787 = vmul.f32 %v785, 1.442695
    %v788 = vpow.pop %v787
    %v789 = vmul.f32 %v786, 1.442695
    %v790 = vpow.pop %v789
    %v791 = vsel %vm778, %v788, 0.0
    %792 = vadd.xlane.f32.xlu0 %v791
    %v793 = vpop.xlane.xlu0 %792
    %v794 = vsel %vm778, %v790, 0.0
    %795 = vadd.xlane.f32.xlu0 %v794
    %v796 = vpop.xlane.xlu0 %795
    %v797 = vrcp.pop %v793
    %v798 = vrcp.pop %v796
    %v799 = vmul.f32 %v788, %v797
    %v800 = vmul.f32 %v790, %v798
    %801 = vrot.lane.b32.xlu0 %v684, 96
    %v802 = vpop.permute.xlu0 %801
    %803 = vrot.lane.b32.xlu0 %v687, 96
    %v804 = vpop.permute.xlu0 %803
    %v808 = vsel %vm778, %v799, 0
    %v811 = vsel %vm778, %v800, 0
    %813 = vmatprep.subr.mxu0 0.0
    %814 = vmatpush1.msra.mxu0 %v802
    %815 = vmatprep.subr.mxu0 0.0
    %816 = vmatpush1.msra.mxu0 %v804
    %817 = vmatprep.subr.mxu0 0.0
    %818 = vmatpush1.msra.mxu0 0.0
    %819 = vmatprep.subr.mxu0 0.0
    %820 = vmatpush1.msra.mxu0 0.0
    %821 = vmatprep.subr.mxu0 0.0
    %822 = vmatpush1.msra.mxu0 0.0
    %823 = vmatprep.subr.mxu0 0.0
    %824 = vmatpush1.msra.mxu0 0.0
    %825 = vmatprep.subr.mxu0 0.0
    %826 = vmatpush1.msra.mxu0 0.0
    %827 = vmatprep.subr.mxu0 0.0
    %828 = vmatpush1.msra.mxu0 0.0
    %829 = vmatprep.subr.mxu0 0.0
    %830 = vmatpush1.msra.mxu0 0.0
    %831 = vmatprep.subr.mxu0 0.0
    %832 = vmatpush1.msra.mxu0 0.0
    %833 = vmatprep.subr.mxu0 0.0
    %834 = vmatpush1.msra.mxu0 0.0
    %835 = vmatprep.subr.mxu0 0.0
    %836 = vmatpush1.msra.mxu0 0.0
    %837 = vmatprep.subr.mxu0 0.0
    %838 = vmatpush1.msra.mxu0 0.0
    %839 = vmatprep.subr.mxu0 0.0
    %840 = vmatpush1.msra.mxu0 0.0
    %841 = vmatprep.subr.mxu0 0.0
    %842 = vmatpush1.msra.mxu0 0.0
    %843 = vmatprep.subr.mxu0 0.0
    %844 = vmatpush1.msra.mxu0 0.0
    %845 = vmatprep.subr.mxu0 0.0
    %846 = vmatpush1.msra.mxu0 0.0
    %847 = vmatprep.subr.mxu0 0.0
    %848 = vmatpush1.msra.mxu0 0.0
    %849 = vmatprep.subr.mxu0 0.0
    %850 = vmatpush1.msra.mxu0 0.0
    %851 = vmatprep.subr.mxu0 0.0
    %852 = vmatpush1.msra.mxu0 0.0
    %853 = vmatprep.subr.mxu0 0.0
    %854 = vmatpush1.msra.mxu0 0.0
    %855 = vmatprep.subr.mxu0 0.0
    %856 = vmatpush1.msra.mxu0 0.0
    %857 = vmatprep.subr.mxu0 0.0
    %858 = vmatpush1.msra.mxu0 0.0
    %859 = vmatprep.subr.mxu0 0.0
    %860 = vmatpush1.msra.mxu0 0.0
    %861 = vmatprep.subr.mxu0 0.0
    %862 = vmatpush1.msra.mxu0 0.0
    %863 = vmatprep.subr.mxu0 0.0
    %864 = vmatpush1.msra.mxu0 0.0
    %865 = vmatprep.subr.mxu0 0.0
    %866 = vmatpush1.msra.mxu0 0.0
    %867 = vmatprep.subr.mxu0 0.0
    %868 = vmatpush1.msra.mxu0 0.0
    %869 = vmatprep.subr.mxu0 0.0
    %870 = vmatpush1.msra.mxu0 0.0
    %871 = vmatprep.subr.mxu0 0.0
    %872 = vmatpush1.msra.mxu0 0.0
    %873 = vmatprep.subr.mxu0 0.0
    %874 = vmatpush1.msra.mxu0 0.0
    %875 = vmatprep.subr.mxu0 0.0
    %876 = vmatpush1.msra.mxu0 0.0
    %877 = vmatprep.mubr.f32.mxu0 0.0
    %878 = vmatmul.mubr.f32.gmra.mrb[0].mxu0 %v808
    %v879 = vpop.f32.mrb[0].mxu0
    %v880 = vadd.f32 0.0, %v879
    %v881 = vpop.f32.mrb[0].mxu0
    %882 = vmatprep.mubr.f32.mxu0 0.0
    %883 = vmatmul.mubr.f32.gmra.mrb[0].mxu0 %v811
    %v884 = vpop.f32.mrb[0].mxu0
    %v885 = vadd.f32 0.0, %v884
    %v886 = vpop.f32.mrb[0].mxu0
    %887 = vdwg.mxu0
    %v888 = vld [vmem:[%s7] sm:$0xff]
    %889 = vrot.lane.b32.xlu0 %v135, 120
    %v890 = vpop.permute.xlu0 %889
    %891 = vrot.lane.b32.xlu0 %v140, 120
    %v892 = vpop.permute.xlu0 %891
    %893 = vrot.lane.b32.xlu0 %v684, 120
    %v894 = vpop.permute.xlu0 %893
    %895 = vrot.lane.b32.xlu0 %v687, 120
    %v896 = vpop.permute.xlu0 %895
    %v897 = vsel %vm690, %v890, 0
    %v899 = vsel %vm690, %v892, 0
    %v901 = vsel %vm690, %v894, 0
    %v903 = vsel %vm690, %v896, 0
    %905 = vmatprep.subr.mxu0 0.0
    %906 = vmatpush1.xpose.msra.mxu0 %v901
    %907 = vmatprep.subr.mxu0 0.0
    %908 = vmatpush1.xpose.msra.mxu0 %v903
    %909 = vmatprep.subr.mxu0 0.0
    %910 = vmatpush1.xpose.msra.mxu0 0.0
    %911 = vmatprep.subr.mxu0 0.0
    %912 = vmatpush1.xpose.msra.mxu0 0.0
    %913 = vmatprep.subr.mxu0 0.0
    %914 = vmatpush1.xpose.msra.mxu0 0.0
    %915 = vmatprep.subr.mxu0 0.0
    %916 = vmatpush1.xpose.msra.mxu0 0.0
    %917 = vmatprep.subr.mxu0 0.0
    %918 = vmatpush1.xpose.msra.mxu0 0.0
    %919 = vmatprep.subr.mxu0 0.0
    %920 = vmatpush1.xpose.msra.mxu0 0.0
    %921 = vmatprep.subr.mxu0 0.0
    %922 = vmatpush1.xpose.msra.mxu0 0.0
    %923 = vmatprep.subr.mxu0 0.0
    %924 = vmatpush1.xpose.msra.mxu0 0.0
    %925 = vmatprep.subr.mxu0 0.0
    %926 = vmatpush1.xpose.msra.mxu0 0.0
    %927 = vmatprep.subr.mxu0 0.0
    %928 = vmatpush1.xpose.msra.mxu0 0.0
    %929 = vmatprep.subr.mxu0 0.0
    %930 = vmatpush1.xpose.msra.mxu0 0.0
    %931 = vmatprep.subr.mxu0 0.0
    %932 = vmatpush1.xpose.msra.mxu0 0.0
    %933 = vmatprep.subr.mxu0 0.0
    %934 = vmatpush1.xpose.msra.mxu0 0.0
    %935 = vmatprep.subr.mxu0 0.0
    %936 = vmatpush1.xpose.msra.mxu0 0.0
    %937 = vmatprep.subr.mxu0 0.0
    %938 = vmatpush1.xpose.msra.mxu0 0.0
    %939 = vmatprep.subr.mxu0 0.0
    %940 = vmatpush1.xpose.msra.mxu0 0.0
    %941 = vmatprep.subr.mxu0 0.0
    %942 = vmatpush1.xpose.msra.mxu0 0.0
    %943 = vmatprep.subr.mxu0 0.0
    %944 = vmatpush1.xpose.msra.mxu0 0.0
    %945 = vmatprep.subr.mxu0 0.0
    %946 = vmatpush1.xpose.msra.mxu0 0.0
    %947 = vmatprep.subr.mxu0 0.0
    %948 = vmatpush1.xpose.msra.mxu0 0.0
    %949 = vmatprep.subr.mxu0 0.0
    %950 = vmatpush1.xpose.msra.mxu0 0.0
    %951 = vmatprep.subr.mxu0 0.0
    %952 = vmatpush1.xpose.msra.mxu0 0.0
    %953 = vmatprep.subr.mxu0 0.0
    %954 = vmatpush1.xpose.msra.mxu0 0.0
    %955 = vmatprep.subr.mxu0 0.0
    %956 = vmatpush1.xpose.msra.mxu0 0.0
    %957 = vmatprep.subr.mxu0 0.0
    %958 = vmatpush1.xpose.msra.mxu0 0.0
    %959 = vmatprep.subr.mxu0 0.0
    %960 = vmatpush1.xpose.msra.mxu0 0.0
    %961 = vmatprep.subr.mxu0 0.0
    %962 = vmatpush1.xpose.msra.mxu0 0.0
    %963 = vmatprep.subr.mxu0 0.0
    %964 = vmatpush1.xpose.msra.mxu0 0.0
    %965 = vmatprep.subr.mxu0 0.0
    %966 = vmatpush1.xpose.msra.mxu0 0.0
    %967 = vmatprep.subr.mxu0 0.0
    %968 = vmatpush1.xpose.msra.mxu0 0.0
    %969 = vmatprep.mubr.f32.mxu0 0.0
    %970 = vmatmul.mubr.f32.gmra.mrb[0].mxu0 %v897
    %v971 = vpop.f32.mrb[0].mxu0
    %v972 = vadd.f32 %v48, %v971
    %v973 = vpop.f32.mrb[0].mxu0
    %974 = vmatprep.mubr.f32.mxu0 0.0
    %975 = vmatmul.mubr.f32.gmra.mrb[0].mxu0 %v899
    %v976 = vpop.f32.mrb[0].mxu0
    %v977 = vadd.f32 %v49, %v976
    %v978 = vpop.f32.mrb[0].mxu0
    %979 = vdwg.mxu0
    %v980 = vsel %vm778, %v972, -inf
    %981 = vmax.xlane.f32.xlu0 %v980
    %v982 = vpop.xlane.xlu0 %981
    %v983 = vsel %vm778, %v977, -inf
    %984 = vmax.xlane.f32.xlu0 %v983
    %v985 = vpop.xlane.xlu0 %984
    %v986 = vsub.f32 %v972, %v982
    %v987 = vsub.f32 %v977, %v985
    %v988 = vmul.f32 %v986, 1.442695
    %v989 = vpow.pop %v988
    %v990 = vmul.f32 %v987, 1.442695
    %v991 = vpow.pop %v990
    %v992 = vsel %vm778, %v989, 0.0
    %993 = vadd.xlane.f32.xlu0 %v992
    %v994 = vpop.xlane.xlu0 %993
    %v995 = vsel %vm778, %v991, 0.0
    %996 = vadd.xlane.f32.xlu0 %v995
    %v997 = vpop.xlane.xlu0 %996
    %v998 = vrcp.pop %v994
    %v999 = vrcp.pop %v997
    %v1000 = vmul.f32 %v989, %v998
    %v1001 = vmul.f32 %v991, %v999
    %1002 = vrot.lane.b32.xlu0 %v684, 88
    %v1003 = vpop.permute.xlu0 %1002
    %1004 = vrot.lane.b32.xlu0 %v687, 88
    %v1005 = vpop.permute.xlu0 %1004
    %v1009 = vsel %vm778, %v1000, 0
    %v1012 = vsel %vm778, %v1001, 0
    %1014 = vmatprep.subr.mxu0 0.0
    %1015 = vmatpush1.msra.mxu0 %v1003
    %1016 = vmatprep.subr.mxu0 0.0
    %1017 = vmatpush1.msra.mxu0 %v1005
    %1018 = vmatprep.subr.mxu0 0.0
    %1019 = vmatpush1.msra.mxu0 0.0
    %1020 = vmatprep.subr.mxu0 0.0
    %1021 = vmatpush1.msra.mxu0 0.0
    %1022 = vmatprep.subr.mxu0 0.0
    %1023 = vmatpush1.msra.mxu0 0.0
    %1024 = vmatprep.subr.mxu0 0.0
    %1025 = vmatpush1.msra.mxu0 0.0
    %1026 = vmatprep.subr.mxu0 0.0
    %1027 = vmatpush1.msra.mxu0 0.0
    %1028 = vmatprep.subr.mxu0 0.0
    %1029 = vmatpush1.msra.mxu0 0.0
    %1030 = vmatprep.subr.mxu0 0.0
    %1031 = vmatpush1.msra.mxu0 0.0
    %1032 = vmatprep.subr.mxu0 0.0
    %1033 = vmatpush1.msra.mxu0 0.0
    %1034 = vmatprep.subr.mxu0 0.0
    %1035 = vmatpush1.msra.mxu0 0.0
    %1036 = vmatprep.subr.mxu0 0.0
    %1037 = vmatpush1.msra.mxu0 0.0
    %1038 = vmatprep.subr.mxu0 0.0
    %1039 = vmatpush1.msra.mxu0 0.0
    %1040 = vmatprep.subr.mxu0 0.0
    %1041 = vmatpush1.msra.mxu0 0.0
    %1042 = vmatprep.subr.mxu0 0.0
    %1043 = vmatpush1.msra.mxu0 0.0
    %1044 = vmatprep.subr.mxu0 0.0
    %1045 = vmatpush1.msra.mxu0 0.0
    %1046 = vmatprep.subr.mxu0 0.0
    %1047 = vmatpush1.msra.mxu0 0.0
    %1048 = vmatprep.subr.mxu0 0.0
    %1049 = vmatpush1.msra.mxu0 0.0
    %1050 = vmatprep.subr.mxu0 0.0
    %1051 = vmatpush1.msra.mxu0 0.0
    %1052 = vmatprep.subr.mxu0 0.0
    %1053 = vmatpush1.msra.mxu0 0.0
    %1054 = vmatprep.subr.mxu0 0.0
    %1055 = vmatpush1.msra.mxu0 0.0
    %1056 = vmatprep.subr.mxu0 0.0
    %1057 = vmatpush1.msra.mxu0 0.0
    %1058 = vmatprep.subr.mxu0 0.0
    %1059 = vmatpush1.msra.mxu0 0.0
    %1060 = vmatprep.subr.mxu0 0.0
    %1061 = vmatpush1.msra.mxu0 0.0
    %1062 = vmatprep.subr.mxu0 0.0
    %1063 = vmatpush1.msra.mxu0 0.0
    %1064 = vmatprep.subr.mxu0 0.0
    %1065 = vmatpush1.msra.mxu0 0.0
    %1066 = vmatprep.subr.mxu0 0.0
    %1067 = vmatpush1.msra.mxu0 0.0
    %1068 = vmatprep.subr.mxu0 0.0
    %1069 = vmatpush1.msra.mxu0 0.0
    %1070 = vmatprep.subr.mxu0 0.0
    %1071 = vmatpush1.msra.mxu0 0.0
    %1072 = vmatprep.subr.mxu0 0.0
    %1073 = vmatpush1.msra.mxu0 0.0
    %1074 = vmatprep.subr.mxu0 0.0
    %1075 = vmatpush1.msra.mxu0 0.0
    %1076 = vmatprep.subr.mxu0 0.0
    %1077 = vmatpush1.msra.mxu0 0.0
    %1078 = vmatprep.mubr.f32.mxu0 0.0
    %1079 = vmatmul.mubr.f32.gmra.mrb[0].mxu0 %v1009
    %v1080 = vpop.f32.mrb[0].mxu0
    %v1081 = vadd.f32 0.0, %v1080
    %v1082 = vpop.f32.mrb[0].mxu0
    %1083 = vmatprep.mubr.f32.mxu0 0.0
    %1084 = vmatmul.mubr.f32.gmra.mrb[0].mxu0 %v1012
    %v1085 = vpop.f32.mrb[0].mxu0
    %v1086 = vadd.f32 0.0, %v1085
    %v1087 = vpop.f32.mrb[0].mxu0
    %1088 = vdwg.mxu0
    %v1089 = vld [vmem:[%s7 + $0x8] sm:$0xff]
    %v1091 = vsel %vm690, %v1081, 0
    %v1094 = vsel %vm690, %v1086, 0
    %1096 = vmatprep.subr.mxu0 0.0
    %1097 = vmatpush1.msra.mxu0 %v1089
    %1098 = vmatprep.subr.mxu0 0.0
    %1099 = vmatpush1.msra.mxu0 0.0
    %1100 = vmatprep.subr.mxu0 0.0
    %1101 = vmatpush1.msra.mxu0 0.0
    %1102 = vmatprep.subr.mxu0 0.0
    %1103 = vmatpush1.msra.mxu0 0.0
    %1104 = vmatprep.subr.mxu0 0.0
    %1105 = vmatpush1.msra.mxu0 0.0
    %1106 = vmatprep.subr.mxu0 0.0
    %1107 = vmatpush1.msra.mxu0 0.0
    %1108 = vmatprep.subr.mxu0 0.0
    %1109 = vmatpush1.msra.mxu0 0.0
    %1110 = vmatprep.subr.mxu0 0.0
    %1111 = vmatpush1.msra.mxu0 0.0
    %1112 = vmatprep.subr.mxu0 0.0
    %1113 = vmatpush1.msra.mxu0 0.0
    %1114 = vmatprep.subr.mxu0 0.0
    %1115 = vmatpush1.msra.mxu0 0.0
    %1116 = vmatprep.subr.mxu0 0.0
    %1117 = vmatpush1.msra.mxu0 0.0
    %1118 = vmatprep.subr.mxu0 0.0
    %1119 = vmatpush1.msra.mxu0 0.0
    %1120 = vmatprep.subr.mxu0 0.0
    %1121 = vmatpush1.msra.mxu0 0.0
    %1122 = vmatprep.subr.mxu0 0.0
    %1123 = vmatpush1.msra.mxu0 0.0
    %1124 = vmatprep.subr.mxu0 0.0
    %1125 = vmatpush1.msra.mxu0 0.0
    %1126 = vmatprep.subr.mxu0 0.0
    %1127 = vmatpush1.msra.mxu0 0.0
    %1128 = vmatprep.subr.mxu0 0.0
    %1129 = vmatpush1.msra.mxu0 0.0
    %1130 = vmatprep.subr.mxu0 0.0
    %1131 = vmatpush1.msra.mxu0 0.0
    %1132 = vmatprep.subr.mxu0 0.0
    %1133 = vmatpush1.msra.mxu0 0.0
    %1134 = vmatprep.subr.mxu0 0.0
    %1135 = vmatpush1.msra.mxu0 0.0
    %1136 = vmatprep.subr.mxu0 0.0
    %1137 = vmatpush1.msra.mxu0 0.0
    %1138 = vmatprep.subr.mxu0 0.0
    %1139 = vmatpush1.msra.mxu0 0.0
    %1140 = vmatprep.subr.mxu0 0.0
    %1141 = vmatpush1.msra.mxu0 0.0
    %1142 = vmatprep.subr.mxu0 0.0
    %1143 = vmatpush1.msra.mxu0 0.0
    %1144 = vmatprep.subr.mxu0 0.0
    %1145 = vmatpush1.msra.mxu0 0.0
    %1146 = vmatprep.subr.mxu0 0.0
    %1147 = vmatpush1.msra.mxu0 0.0
    %1148 = vmatprep.subr.mxu0 0.0
    %1149 = vmatpush1.msra.mxu0 0.0
    %1150 = vmatprep.subr.mxu0 0.0
    %1151 = vmatpush1.msra.mxu0 0.0
    %1152 = vmatprep.subr.mxu0 0.0
    %1153 = vmatpush1.msra.mxu0 0.0
    %1154 = vmatprep.subr.mxu0 0.0
    %1155 = vmatpush1.msra.mxu0 0.0
    %1156 = vmatprep.subr.mxu0 0.0
    %1157 = vmatpush1.msra.mxu0 0.0
    %1158 = vmatprep.subr.mxu0 0.0
    %1159 = vmatpush1.msra.mxu0 0.0
    %1160 = vmatprep.mubr.f32.mxu0 0.0
    %1161 = vmatmul.mubr.f32.gmra.mrb[0].mxu0 %v1091
    %v1162 = vpop.f32.mrb[0].mxu0
    %v1163 = vadd.f32 0.0, %v1162
    %v1164 = vpop.f32.mrb[0].mxu0
    %1165 = vmatprep.mubr.f32.mxu0 0.0
    %1166 = vmatmul.mubr.f32.gmra.mrb[0].mxu0 %v1094
    %v1167 = vpop.f32.mrb[0].mxu0
    %v1168 = vadd.f32 0.0, %v1167
    %v1169 = vpop.f32.mrb[0].mxu0
    %1170 = vdwg.mxu0
    %v1172 = vsel %vm690, %v880, 0
    %v1175 = vsel %vm690, %v885, 0
    %1177 = vmatprep.subr.mxu0 0.0
    %1178 = vmatpush1.msra.mxu0 %v888
    %1179 = vmatprep.subr.mxu0 0.0
    %1180 = vmatpush1.msra.mxu0 0.0
    %1181 = vmatprep.subr.mxu0 0.0
    %1182 = vmatpush1.msra.mxu0 0.0
    %1183 = vmatprep.subr.mxu0 0.0
    %1184 = vmatpush1.msra.mxu0 0.0
    %1185 = vmatprep.subr.mxu0 0.0
    %1186 = vmatpush1.msra.mxu0 0.0
    %1187 = vmatprep.subr.mxu0 0.0
    %1188 = vmatpush1.msra.mxu0 0.0
    %1189 = vmatprep.subr.mxu0 0.0
    %1190 = vmatpush1.msra.mxu0 0.0
    %1191 = vmatprep.subr.mxu0 0.0
    %1192 = vmatpush1.msra.mxu0 0.0
    %1193 = vmatprep.subr.mxu0 0.0
    %1194 = vmatpush1.msra.mxu0 0.0
    %1195 = vmatprep.subr.mxu0 0.0
    %1196 = vmatpush1.msra.mxu0 0.0
    %1197 = vmatprep.subr.mxu0 0.0
    %1198 = vmatpush1.msra.mxu0 0.0
    %1199 = vmatprep.subr.mxu0 0.0
    %1200 = vmatpush1.msra.mxu0 0.0
    %1201 = vmatprep.subr.mxu0 0.0
    %1202 = vmatpush1.msra.mxu0 0.0
    %1203 = vmatprep.subr.mxu0 0.0
    %1204 = vmatpush1.msra.mxu0 0.0
    %1205 = vmatprep.subr.mxu0 0.0
    %1206 = vmatpush1.msra.mxu0 0.0
    %1207 = vmatprep.subr.mxu0 0.0
    %1208 = vmatpush1.msra.mxu0 0.0
    %1209 = vmatprep.subr.mxu0 0.0
    %1210 = vmatpush1.msra.mxu0 0.0
    %1211 = vmatprep.subr.mxu0 0.0
    %1212 = vmatpush1.msra.mxu0 0.0
    %1213 = vmatprep.subr.mxu0 0.0
    %1214 = vmatpush1.msra.mxu0 0.0
    %1215 = vmatprep.subr.mxu0 0.0
    %1216 = vmatpush1.msra.mxu0 0.0
    %1217 = vmatprep.subr.mxu0 0.0
    %1218 = vmatpush1.msra.mxu0 0.0
    %1219 = vmatprep.subr.mxu0 0.0
    %1220 = vmatpush1.msra.mxu0 0.0
    %1221 = vmatprep.subr.mxu0 0.0
    %1222 = vmatpush1.msra.mxu0 0.0
    %1223 = vmatprep.subr.mxu0 0.0
    %1224 = vmatpush1.msra.mxu0 0.0
    %1225 = vmatprep.subr.mxu0 0.0
    %1226 = vmatpush1.msra.mxu0 0.0
    %1227 = vmatprep.subr.mxu0 0.0
    %1228 = vmatpush1.msra.mxu0 0.0
    %1229 = vmatprep.subr.mxu0 0.0
    %1230 = vmatpush1.msra.mxu0 0.0
    %1231 = vmatprep.subr.mxu0 0.0
    %1232 = vmatpush1.msra.mxu0 0.0
    %1233 = vmatprep.subr.mxu0 0.0
    %1234 = vmatpush1.msra.mxu0 0.0
    %1235 = vmatprep.subr.mxu0 0.0
    %1236 = vmatpush1.msra.mxu0 0.0
    %1237 = vmatprep.subr.mxu0 0.0
    %1238 = vmatpush1.msra.mxu0 0.0
    %1239 = vmatprep.subr.mxu0 0.0
    %1240 = vmatpush1.msra.mxu0 0.0
    %1241 = vmatprep.mubr.f32.mxu0 0.0
    %1242 = vmatmul.mubr.f32.gmra.mrb[0].mxu0 %v1172
    %v1243 = vpop.f32.mrb[0].mxu0
    %v1244 = vadd.f32 %v1163, %v1243
    %v1245 = vpop.f32.mrb[0].mxu0
    %1246 = vmatprep.mubr.f32.mxu0 0.0
    %1247 = vmatmul.mubr.f32.gmra.mrb[0].mxu0 %v1175
    %v1248 = vpop.f32.mrb[0].mxu0
    %v1249 = vadd.f32 %v1168, %v1248
    %v1250 = vpop.f32.mrb[0].mxu0
    %1251 = vdwg.mxu0
    %1252 = vrot.lane.b32.xlu0 %v135, 112
    %v1253 = vpop.permute.xlu0 %1252
    %1254 = vrot.lane.b32.xlu0 %v140, 112
    %v1255 = vpop.permute.xlu0 %1254
    %1256 = vrot.lane.b32.xlu0 %v684, 112
    %v1257 = vpop.permute.xlu0 %1256
    %1258 = vrot.lane.b32.xlu0 %v687, 112
    %v1259 = vpop.permute.xlu0 %1258
    %v1260 = vsel %vm690, %v1253, 0
    %v1262 = vsel %vm690, %v1255, 0
    %v1264 = vsel %vm690, %v1257, 0
    %v1266 = vsel %vm690, %v1259, 0
    %1268 = vmatprep.subr.mxu0 0.0
    %1269 = vmatpush1.xpose.msra.mxu0 %v1264
    %1270 = vmatprep.subr.mxu0 0.0
    %1271 = vmatpush1.xpose.msra.mxu0 %v1266
    %1272 = vmatprep.subr.mxu0 0.0
    %1273 = vmatpush1.xpose.msra.mxu0 0.0
    %1274 = vmatprep.subr.mxu0 0.0
    %1275 = vmatpush1.xpose.msra.mxu0 0.0
    %1276 = vmatprep.subr.mxu0 0.0
    %1277 = vmatpush1.xpose.msra.mxu0 0.0
    %1278 = vmatprep.subr.mxu0 0.0
    %1279 = vmatpush1.xpose.msra.mxu0 0.0
    %1280 = vmatprep.subr.mxu0 0.0
    %1281 = vmatpush1.xpose.msra.mxu0 0.0
    %1282 = vmatprep.subr.mxu0 0.0
    %1283 = vmatpush1.xpose.msra.mxu0 0.0
    %1284 = vmatprep.subr.mxu0 0.0
    %1285 = vmatpush1.xpose.msra.mxu0 0.0
    %1286 = vmatprep.subr.mxu0 0.0
    %1287 = vmatpush1.xpose.msra.mxu0 0.0
    %1288 = vmatprep.subr.mxu0 0.0
    %1289 = vmatpush1.xpose.msra.mxu0 0.0
    %1290 = vmatprep.subr.mxu0 0.0
    %1291 = vmatpush1.xpose.msra.mxu0 0.0
    %1292 = vmatprep.subr.mxu0 0.0
    %1293 = vmatpush1.xpose.msra.mxu0 0.0
    %1294 = vmatprep.subr.mxu0 0.0
    %1295 = vmatpush1.xpose.msra.mxu0 0.0
    %1296 = vmatprep.subr.mxu0 0.0
    %1297 = vmatpush1.xpose.msra.mxu0 0.0
    %1298 = vmatprep.subr.mxu0 0.0
    %1299 = vmatpush1.xpose.msra.mxu0 0.0
    %1300 = vmatprep.subr.mxu0 0.0
    %1301 = vmatpush1.xpose.msra.mxu0 0.0
    %1302 = vmatprep.subr.mxu0 0.0
    %1303 = vmatpush1.xpose.msra.mxu0 0.0
    %1304 = vmatprep.subr.mxu0 0.0
    %1305 = vmatpush1.xpose.msra.mxu0 0.0
    %1306 = vmatprep.subr.mxu0 0.0
    %1307 = vmatpush1.xpose.msra.mxu0 0.0
    %1308 = vmatprep.subr.mxu0 0.0
    %1309 = vmatpush1.xpose.msra.mxu0 0.0
    %1310 = vmatprep.subr.mxu0 0.0
    %1311 = vmatpush1.xpose.msra.mxu0 0.0
    %1312 = vmatprep.subr.mxu0 0.0
    %1313 = vmatpush1.xpose.msra.mxu0 0.0
    %1314 = vmatprep.subr.mxu0 0.0
    %1315 = vmatpush1.xpose.msra.mxu0 0.0
    %1316 = vmatprep.subr.mxu0 0.0
    %1317 = vmatpush1.xpose.msra.mxu0 0.0
    %1318 = vmatprep.subr.mxu0 0.0
    %1319 = vmatpush1.xpose.msra.mxu0 0.0
    %1320 = vmatprep.subr.mxu0 0.0
    %1321 = vmatpush1.xpose.msra.mxu0 0.0
    %1322 = vmatprep.subr.mxu0 0.0
    %1323 = vmatpush1.xpose.msra.mxu0 0.0
    %1324 = vmatprep.subr.mxu0 0.0
    %1325 = vmatpush1.xpose.msra.mxu0 0.0
    %1326 = vmatprep.subr.mxu0 0.0
    %1327 = vmatpush1.xpose.msra.mxu0 0.0
    %1328 = vmatprep.subr.mxu0 0.0
    %1329 = vmatpush1.xpose.msra.mxu0 0.0
    %1330 = vmatprep.subr.mxu0 0.0
    %1331 = vmatpush1.xpose.msra.mxu0 0.0
    %1332 = vmatprep.mubr.f32.mxu0 0.0
    %1333 = vmatmul.mubr.f32.gmra.mrb[0].mxu0 %v1260
    %v1334 = vpop.f32.mrb[0].mxu0
    %v1335 = vadd.f32 %v48, %v1334
    %v1336 = vpop.f32.mrb[0].mxu0
    %1337 = vmatprep.mubr.f32.mxu0 0.0
    %1338 = vmatmul.mubr.f32.gmra.mrb[0].mxu0 %v1262
    %v1339 = vpop.f32.mrb[0].mxu0
    %v1340 = vadd.f32 %v49, %v1339
    %v1341 = vpop.f32.mrb[0].mxu0
    %1342 = vdwg.mxu0
    %v1343 = vsel %vm778, %v1335, -inf
    %1344 = vmax.xlane.f32.xlu0 %v1343
    %v1345 = vpop.xlane.xlu0 %1344
    %v1346 = vsel %vm778, %v1340, -inf
    %1347 = vmax.xlane.f32.xlu0 %v1346
    %v1348 = vpop.xlane.xlu0 %1347
    %v1349 = vsub.f32 %v1335, %v1345
    %v1350 = vsub.f32 %v1340, %v1348
    %v1351 = vmul.f32 %v1349, 1.442695
    %v1352 = vpow.pop %v1351
    %v1353 = vmul.f32 %v1350, 1.442695
    %v1354 = vpow.pop %v1353
    %v1355 = vsel %vm778, %v1352, 0.0
    %1356 = vadd.xlane.f32.xlu0 %v1355
    %v1357 = vpop.xlane.xlu0 %1356
    %v1358 = vsel %vm778, %v1354, 0.0
    %1359 = vadd.xlane.f32.xlu0 %v1358
    %v1360 = vpop.xlane.xlu0 %1359
    %v1361 = vrcp.pop %v1357
    %v1362 = vrcp.pop %v1360
    %v1363 = vmul.f32 %v1352, %v1361
    %v1364 = vmul.f32 %v1354, %v1362
    %1365 = vrot.lane.b32.xlu0 %v684, 80
    %v1366 = vpop.permute.xlu0 %1365
    %1367 = vrot.lane.b32.xlu0 %v687, 80
    %v1368 = vpop.permute.xlu0 %1367
    %v1372 = vsel %vm778, %v1363, 0
    %v1375 = vsel %vm778, %v1364, 0
    %1377 = vmatprep.subr.mxu0 0.0
    %1378 = vmatpush1.msra.mxu0 %v1366
    %1379 = vmatprep.subr.mxu0 0.0
    %1380 = vmatpush1.msra.mxu0 %v1368
    %1381 = vmatprep.subr.mxu0 0.0
    %1382 = vmatpush1.msra.mxu0 0.0
    %1383 = vmatprep.subr.mxu0 0.0
    %1384 = vmatpush1.msra.mxu0 0.0
    %1385 = vmatprep.subr.mxu0 0.0
    %1386 = vmatpush1.msra.mxu0 0.0
    %1387 = vmatprep.subr.mxu0 0.0
    %1388 = vmatpush1.msra.mxu0 0.0
    %1389 = vmatprep.subr.mxu0 0.0
    %1390 = vmatpush1.msra.mxu0 0.0
    %1391 = vmatprep.subr.mxu0 0.0
    %1392 = vmatpush1.msra.mxu0 0.0
    %1393 = vmatprep.subr.mxu0 0.0
    %1394 = vmatpush1.msra.mxu0 0.0
    %1395 = vmatprep.subr.mxu0 0.0
    %1396 = vmatpush1.msra.mxu0 0.0
    %1397 = vmatprep.subr.mxu0 0.0
    %1398 = vmatpush1.msra.mxu0 0.0
    %1399 = vmatprep.subr.mxu0 0.0
    %1400 = vmatpush1.msra.mxu0 0.0
    %1401 = vmatprep.subr.mxu0 0.0
    %1402 = vmatpush1.msra.mxu0 0.0
    %1403 = vmatprep.subr.mxu0 0.0
    %1404 = vmatpush1.msra.mxu0 0.0
    %1405 = vmatprep.subr.mxu0 0.0
    %1406 = vmatpush1.msra.mxu0 0.0
    %1407 = vmatprep.subr.mxu0 0.0
    %1408 = vmatpush1.msra.mxu0 0.0
    %1409 = vmatprep.subr.mxu0 0.0
    %1410 = vmatpush1.msra.mxu0 0.0
    %1411 = vmatprep.subr.mxu0 0.0
    %1412 = vmatpush1.msra.mxu0 0.0
    %1413 = vmatprep.subr.mxu0 0.0
    %1414 = vmatpush1.msra.mxu0 0.0
    %1415 = vmatprep.subr.mxu0 0.0
    %1416 = vmatpush1.msra.mxu0 0.0
    %1417 = vmatprep.subr.mxu0 0.0
    %1418 = vmatpush1.msra.mxu0 0.0
    %1419 = vmatprep.subr.mxu0 0.0
    %1420 = vmatpush1.msra.mxu0 0.0
    %1421 = vmatprep.subr.mxu0 0.0
    %1422 = vmatpush1.msra.mxu0 0.0
    %1423 = vmatprep.subr.mxu0 0.0
    %1424 = vmatpush1.msra.mxu0 0.0
    %1425 = vmatprep.subr.mxu0 0.0
    %1426 = vmatpush1.msra.mxu0 0.0
    %1427 = vmatprep.subr.mxu0 0.0
    %1428 = vmatpush1.msra.mxu0 0.0
    %1429 = vmatprep.subr.mxu0 0.0
    %1430 = vmatpush1.msra.mxu0 0.0
    %1431 = vmatprep.subr.mxu0 0.0
    %1432 = vmatpush1.msra.mxu0 0.0
    %1433 = vmatprep.subr.mxu0 0.0
    %1434 = vmatpush1.msra.mxu0 0.0
    %1435 = vmatprep.subr.mxu0 0.0
    %1436 = vmatpush1.msra.mxu0 0.0
    %1437 = vmatprep.subr.mxu0 0.0
    %1438 = vmatpush1.msra.mxu0 0.0
    %1439 = vmatprep.subr.mxu0 0.0
    %1440 = vmatpush1.msra.mxu0 0.0
    %1441 = vmatprep.mubr.f32.mxu0 0.0
    %1442 = vmatmul.mubr.f32.gmra.mrb[0].mxu0 %v1372
    %v1443 = vpop.f32.mrb[0].mxu0
    %v1444 = vadd.f32 0.0, %v1443
    %v1445 = vpop.f32.mrb[0].mxu0
    %1446 = vmatprep.mubr.f32.mxu0 0.0
    %1447 = vmatmul.mubr.f32.gmra.mrb[0].mxu0 %v1375
    %v1448 = vpop.f32.mrb[0].mxu0
    %v1449 = vadd.f32 0.0, %v1448
    %v1450 = vpop.f32.mrb[0].mxu0
    %1451 = vdwg.mxu0
    %v1452 = vld [vmem:[%s7 + $0x10] sm:$0xff]
    %v1454 = vsel %vm690, %v1444, 0
    %v1457 = vsel %vm690, %v1449, 0
    %1459 = vmatprep.subr.mxu0 0.0
    %1460 = vmatpush1.msra.mxu0 %v1452
    %1461 = vmatprep.subr.mxu0 0.0
    %1462 = vmatpush1.msra.mxu0 0.0
    %1463 = vmatprep.subr.mxu0 0.0
    %1464 = vmatpush1.msra.mxu0 0.0
    %1465 = vmatprep.subr.mxu0 0.0
    %1466 = vmatpush1.msra.mxu0 0.0
    %1467 = vmatprep.subr.mxu0 0.0
    %1468 = vmatpush1.msra.mxu0 0.0
    %1469 = vmatprep.subr.mxu0 0.0
    %1470 = vmatpush1.msra.mxu0 0.0
    %1471 = vmatprep.subr.mxu0 0.0
    %1472 = vmatpush1.msra.mxu0 0.0
    %1473 = vmatprep.subr.mxu0 0.0
    %1474 = vmatpush1.msra.mxu0 0.0
    %1475 = vmatprep.subr.mxu0 0.0
    %1476 = vmatpush1.msra.mxu0 0.0
    %1477 = vmatprep.subr.mxu0 0.0
    %1478 = vmatpush1.msra.mxu0 0.0
    %1479 = vmatprep.subr.mxu0 0.0
    %1480 = vmatpush1.msra.mxu0 0.0
    %1481 = vmatprep.subr.mxu0 0.0
    %1482 = vmatpush1.msra.mxu0 0.0
    %1483 = vmatprep.subr.mxu0 0.0
    %1484 = vmatpush1.msra.mxu0 0.0
    %1485 = vmatprep.subr.mxu0 0.0
    %1486 = vmatpush1.msra.mxu0 0.0
    %1487 = vmatprep.subr.mxu0 0.0
    %1488 = vmatpush1.msra.mxu0 0.0
    %1489 = vmatprep.subr.mxu0 0.0
    %1490 = vmatpush1.msra.mxu0 0.0
    %1491 = vmatprep.subr.mxu0 0.0
    %1492 = vmatpush1.msra.mxu0 0.0
    %1493 = vmatprep.subr.mxu0 0.0
    %1494 = vmatpush1.msra.mxu0 0.0
    %1495 = vmatprep.subr.mxu0 0.0
    %1496 = vmatpush1.msra.mxu0 0.0
    %1497 = vmatprep.subr.mxu0 0.0
    %1498 = vmatpush1.msra.mxu0 0.0
    %1499 = vmatprep.subr.mxu0 0.0
    %1500 = vmatpush1.msra.mxu0 0.0
    %1501 = vmatprep.subr.mxu0 0.0
    %1502 = vmatpush1.msra.mxu0 0.0
    %1503 = vmatprep.subr.mxu0 0.0
    %1504 = vmatpush1.msra.mxu0 0.0
    %1505 = vmatprep.subr.mxu0 0.0
    %1506 = vmatpush1.msra.mxu0 0.0
    %1507 = vmatprep.subr.mxu0 0.0
    %1508 = vmatpush1.msra.mxu0 0.0
    %1509 = vmatprep.subr.mxu0 0.0
    %1510 = vmatpush1.msra.mxu0 0.0
    %1511 = vmatprep.subr.mxu0 0.0
    %1512 = vmatpush1.msra.mxu0 0.0
    %1513 = vmatprep.subr.mxu0 0.0
    %1514 = vmatpush1.msra.mxu0 0.0
    %1515 = vmatprep.subr.mxu0 0.0
    %1516 = vmatpush1.msra.mxu0 0.0
    %1517 = vmatprep.subr.mxu0 0.0
    %1518 = vmatpush1.msra.mxu0 0.0
    %1519 = vmatprep.subr.mxu0 0.0
    %1520 = vmatpush1.msra.mxu0 0.0
    %1521 = vmatprep.subr.mxu0 0.0
    %1522 = vmatpush1.msra.mxu0 0.0
    %1523 = vmatprep.mubr.f32.mxu0 0.0
    %1524 = vmatmul.mubr.f32.gmra.mrb[0].mxu0 %v1454
    %v1525 = vpop.f32.mrb[0].mxu0
    %v1526 = vadd.f32 0.0, %v1525
    %v1527 = vpop.f32.mrb[0].mxu0
    %1528 = vmatprep.mubr.f32.mxu0 0.0
    %1529 = vmatmul.mubr.f32.gmra.mrb[0].mxu0 %v1457
    %v1530 = vpop.f32.mrb[0].mxu0
    %v1531 = vadd.f32 0.0, %v1530
    %v1532 = vpop.f32.mrb[0].mxu0
    %1533 = vdwg.mxu0
    %v1534 = vadd.f32 %v1244, %v1526
    %v1535 = vadd.f32 %v1249, %v1531
    %1536 = vrot.lane.b32.xlu0 %v135, 104
    %v1537 = vpop.permute.xlu0 %1536
    %1538 = vrot.lane.b32.xlu0 %v140, 104
    %v1539 = vpop.permute.xlu0 %1538
    %1540 = vrot.lane.b32.xlu0 %v684, 104
    %v1541 = vpop.permute.xlu0 %1540
    %1542 = vrot.lane.b32.xlu0 %v687, 104
    %v1543 = vpop.permute.xlu0 %1542
    %v1544 = vsel %vm690, %v1537, 0
    %v1546 = vsel %vm690, %v1539, 0
    %v1548 = vsel %vm690, %v1541, 0
    %v1550 = vsel %vm690, %v1543, 0
    %1552 = vmatprep.subr.mxu0 0.0
    %1553 = vmatpush1.xpose.msra.mxu0 %v1548
    %1554 = vmatprep.subr.mxu0 0.0
    %1555 = vmatpush1.xpose.msra.mxu0 %v1550
    %1556 = vmatprep.subr.mxu0 0.0
    %1557 = vmatpush1.xpose.msra.mxu0 0.0
    %1558 = vmatprep.subr.mxu0 0.0
    %1559 = vmatpush1.xpose.msra.mxu0 0.0
    %1560 = vmatprep.subr.mxu0 0.0
    %1561 = vmatpush1.xpose.msra.mxu0 0.0
    %1562 = vmatprep.subr.mxu0 0.0
    %1563 = vmatpush1.xpose.msra.mxu0 0.0
    %1564 = vmatprep.subr.mxu0 0.0
    %1565 = vmatpush1.xpose.msra.mxu0 0.0
    %1566 = vmatprep.subr.mxu0 0.0
    %1567 = vmatpush1.xpose.msra.mxu0 0.0
    %1568 = vmatprep.subr.mxu0 0.0
    %1569 = vmatpush1.xpose.msra.mxu0 0.0
    %1570 = vmatprep.subr.mxu0 0.0
    %1571 = vmatpush1.xpose.msra.mxu0 0.0
    %1572 = vmatprep.subr.mxu0 0.0
    %1573 = vmatpush1.xpose.msra.mxu0 0.0
    %1574 = vmatprep.subr.mxu0 0.0
    %1575 = vmatpush1.xpose.msra.mxu0 0.0
    %1576 = vmatprep.subr.mxu0 0.0
    %1577 = vmatpush1.xpose.msra.mxu0 0.0
    %1578 = vmatprep.subr.mxu0 0.0
    %1579 = vmatpush1.xpose.msra.mxu0 0.0
    %1580 = vmatprep.subr.mxu0 0.0
    %1581 = vmatpush1.xpose.msra.mxu0 0.0
    %1582 = vmatprep.subr.mxu0 0.0
    %1583 = vmatpush1.xpose.msra.mxu0 0.0
    %1584 = vmatprep.subr.mxu0 0.0
    %1585 = vmatpush1.xpose.msra.mxu0 0.0
    %1586 = vmatprep.subr.mxu0 0.0
    %1587 = vmatpush1.xpose.msra.mxu0 0.0
    %1588 = vmatprep.subr.mxu0 0.0
    %1589 = vmatpush1.xpose.msra.mxu0 0.0
    %1590 = vmatprep.subr.mxu0 0.0
    %1591 = vmatpush1.xpose.msra.mxu0 0.0
    %1592 = vmatprep.subr.mxu0 0.0
    %1593 = vmatpush1.xpose.msra.mxu0 0.0
    %1594 = vmatprep.subr.mxu0 0.0
    %1595 = vmatpush1.xpose.msra.mxu0 0.0
    %1596 = vmatprep.subr.mxu0 0.0
    %1597 = vmatpush1.xpose.msra.mxu0 0.0
    %1598 = vmatprep.subr.mxu0 0.0
    %1599 = vmatpush1.xpose.msra.mxu0 0.0
    %1600 = vmatprep.subr.mxu0 0.0
    %1601 = vmatpush1.xpose.msra.mxu0 0.0
    %1602 = vmatprep.subr.mxu0 0.0
    %1603 = vmatpush1.xpose.msra.mxu0 0.0
    %1604 = vmatprep.subr.mxu0 0.0
    %1605 = vmatpush1.xpose.msra.mxu0 0.0
    %1606 = vmatprep.subr.mxu0 0.0
    %1607 = vmatpush1.xpose.msra.mxu0 0.0
    %1608 = vmatprep.subr.mxu0 0.0
    %1609 = vmatpush1.xpose.msra.mxu0 0.0
    %1610 = vmatprep.subr.mxu0 0.0
    %1611 = vmatpush1.xpose.msra.mxu0 0.0
    %1612 = vmatprep.subr.mxu0 0.0
    %1613 = vmatpush1.xpose.msra.mxu0 0.0
    %1614 = vmatprep.subr.mxu0 0.0
    %1615 = vmatpush1.xpose.msra.mxu0 0.0
    %1616 = vmatprep.mubr.f32.mxu0 0.0
    %1617 = vmatmul.mubr.f32.gmra.mrb[0].mxu0 %v1544
    %v1618 = vpop.f32.mrb[0].mxu0
    %v1619 = vadd.f32 %v48, %v1618
    %v1620 = vpop.f32.mrb[0].mxu0
    %1621 = vmatprep.mubr.f32.mxu0 0.0
    %1622 = vmatmul.mubr.f32.gmra.mrb[0].mxu0 %v1546
    %v1623 = vpop.f32.mrb[0].mxu0
    %v1624 = vadd.f32 %v49, %v1623
    %v1625 = vpop.f32.mrb[0].mxu0
    %1626 = vdwg.mxu0
    %v1627 = vsel %vm778, %v1619, -inf
    %1628 = vmax.xlane.f32.xlu0 %v1627
    %v1629 = vpop.xlane.xlu0 %1628
    %v1630 = vsel %vm778, %v1624, -inf
    %1631 = vmax.xlane.f32.xlu0 %v1630
    %v1632 = vpop.xlane.xlu0 %1631
    %v1633 = vsub.f32 %v1619, %v1629
    %v1634 = vsub.f32 %v1624, %v1632
    %v1635 = vmul.f32 %v1633, 1.442695
    %v1636 = vpow.pop %v1635
    %v1637 = vmul.f32 %v1634, 1.442695
    %v1638 = vpow.pop %v1637
    %v1639 = vsel %vm778, %v1636, 0.0
    %1640 = vadd.xlane.f32.xlu0 %v1639
    %v1641 = vpop.xlane.xlu0 %1640
    %v1642 = vsel %vm778, %v1638, 0.0
    %1643 = vadd.xlane.f32.xlu0 %v1642
    %v1644 = vpop.xlane.xlu0 %1643
    %v1645 = vrcp.pop %v1641
    %v1646 = vrcp.pop %v1644
    %v1647 = vmul.f32 %v1636, %v1645
    %v1648 = vmul.f32 %v1638, %v1646
    %1649 = vrot.lane.b32.xlu0 %v684, 72
    %v1650 = vpop.permute.xlu0 %1649
    %1651 = vrot.lane.b32.xlu0 %v687, 72
    %v1652 = vpop.permute.xlu0 %1651
    %v1656 = vsel %vm778, %v1647, 0
    %v1659 = vsel %vm778, %v1648, 0
    %1661 = vmatprep.subr.mxu0 0.0
    %1662 = vmatpush1.msra.mxu0 %v1650
    %1663 = vmatprep.subr.mxu0 0.0
    %1664 = vmatpush1.msra.mxu0 %v1652
    %1665 = vmatprep.subr.mxu0 0.0
    %1666 = vmatpush1.msra.mxu0 0.0
    %1667 = vmatprep.subr.mxu0 0.0
    %1668 = vmatpush1.msra.mxu0 0.0
    %1669 = vmatprep.subr.mxu0 0.0
    %1670 = vmatpush1.msra.mxu0 0.0
    %1671 = vmatprep.subr.mxu0 0.0
    %1672 = vmatpush1.msra.mxu0 0.0
    %1673 = vmatprep.subr.mxu0 0.0
    %1674 = vmatpush1.msra.mxu0 0.0
    %1675 = vmatprep.subr.mxu0 0.0
    %1676 = vmatpush1.msra.mxu0 0.0
    %1677 = vmatprep.subr.mxu0 0.0
    %1678 = vmatpush1.msra.mxu0 0.0
    %1679 = vmatprep.subr.mxu0 0.0
    %1680 = vmatpush1.msra.mxu0 0.0
    %1681 = vmatprep.subr.mxu0 0.0
    %1682 = vmatpush1.msra.mxu0 0.0
    %1683 = vmatprep.subr.mxu0 0.0
    %1684 = vmatpush1.msra.mxu0 0.0
    %1685 = vmatprep.subr.mxu0 0.0
    %1686 = vmatpush1.msra.mxu0 0.0
    %1687 = vmatprep.subr.mxu0 0.0
    %1688 = vmatpush1.msra.mxu0 0.0
    %1689 = vmatprep.subr.mxu0 0.0
    %1690 = vmatpush1.msra.mxu0 0.0
    %1691 = vmatprep.subr.mxu0 0.0
    %1692 = vmatpush1.msra.mxu0 0.0
    %1693 = vmatprep.subr.mxu0 0.0
    %1694 = vmatpush1.msra.mxu0 0.0
    %1695 = vmatprep.subr.mxu0 0.0
    %1696 = vmatpush1.msra.mxu0 0.0
    %1697 = vmatprep.subr.mxu0 0.0
    %1698 = vmatpush1.msra.mxu0 0.0
    %1699 = vmatprep.subr.mxu0 0.0
    %1700 = vmatpush1.msra.mxu0 0.0
    %1701 = vmatprep.subr.mxu0 0.0
    %1702 = vmatpush1.msra.mxu0 0.0
    %1703 = vmatprep.subr.mxu0 0.0
    %1704 = vmatpush1.msra.mxu0 0.0
    %1705 = vmatprep.subr.mxu0 0.0
    %1706 = vmatpush1.msra.mxu0 0.0
    %1707 = vmatprep.subr.mxu0 0.0
    %1708 = vmatpush1.msra.mxu0 0.0
    %1709 = vmatprep.subr.mxu0 0.0
    %1710 = vmatpush1.msra.mxu0 0.0
    %1711 = vmatprep.subr.mxu0 0.0
    %1712 = vmatpush1.msra.mxu0 0.0
    %1713 = vmatprep.subr.mxu0 0.0
    %1714 = vmatpush1.msra.mxu0 0.0
    %1715 = vmatprep.subr.mxu0 0.0
    %1716 = vmatpush1.msra.mxu0 0.0
    %1717 = vmatprep.subr.mxu0 0.0
    %1718 = vmatpush1.msra.mxu0 0.0
    %1719 = vmatprep.subr.mxu0 0.0
    %1720 = vmatpush1.msra.mxu0 0.0
    %1721 = vmatprep.subr.mxu0 0.0
    %1722 = vmatpush1.msra.mxu0 0.0
    %1723 = vmatprep.subr.mxu0 0.0
    %1724 = vmatpush1.msra.mxu0 0.0
    %1725 = vmatprep.mubr.f32.mxu0 0.0
    %1726 = vmatmul.mubr.f32.gmra.mrb[0].mxu0 %v1656
    %v1727 = vpop.f32.mrb[0].mxu0
    %v1728 = vadd.f32 0.0, %v1727
    %v1729 = vpop.f32.mrb[0].mxu0
    %1730 = vmatprep.mubr.f32.mxu0 0.0
    %1731 = vmatmul.mubr.f32.gmra.mrb[0].mxu0 %v1659
    %v1732 = vpop.f32.mrb[0].mxu0
    %v1733 = vadd.f32 0.0, %v1732
    %v1734 = vpop.f32.mrb[0].mxu0
    %1735 = vdwg.mxu0
    %v1736 = vld [vmem:[%s7 + $0x18] sm:$0xff]
    %v1738 = vsel %vm690, %v1728, 0
    %v1741 = vsel %vm690, %v1733, 0
    %1743 = vmatprep.subr.mxu0 0.0
    %1744 = vmatpush1.msra.mxu0 %v1736
    %1745 = vmatprep.subr.mxu0 0.0
    %1746 = vmatpush1.msra.mxu0 0.0
    %1747 = vmatprep.subr.mxu0 0.0
    %1748 = vmatpush1.msra.mxu0 0.0
    %1749 = vmatprep.subr.mxu0 0.0
    %1750 = vmatpush1.msra.mxu0 0.0
    %1751 = vmatprep.subr.mxu0 0.0
    %1752 = vmatpush1.msra.mxu0 0.0
    %1753 = vmatprep.subr.mxu0 0.0
    %1754 = vmatpush1.msra.mxu0 0.0
    %1755 = vmatprep.subr.mxu0 0.0
    %1756 = vmatpush1.msra.mxu0 0.0
    %1757 = vmatprep.subr.mxu0 0.0
    %1758 = vmatpush1.msra.mxu0 0.0
    %1759 = vmatprep.subr.mxu0 0.0
    %1760 = vmatpush1.msra.mxu0 0.0
    %1761 = vmatprep.subr.mxu0 0.0
    %1762 = vmatpush1.msra.mxu0 0.0
    %1763 = vmatprep.subr.mxu0 0.0
    %1764 = vmatpush1.msra.mxu0 0.0
    %1765 = vmatprep.subr.mxu0 0.0
    %1766 = vmatpush1.msra.mxu0 0.0
    %1767 = vmatprep.subr.mxu0 0.0
    %1768 = vmatpush1.msra.mxu0 0.0
    %1769 = vmatprep.subr.mxu0 0.0
    %1770 = vmatpush1.msra.mxu0 0.0
    %1771 = vmatprep.subr.mxu0 0.0
    %1772 = vmatpush1.msra.mxu0 0.0
    %1773 = vmatprep.subr.mxu0 0.0
    %1774 = vmatpush1.msra.mxu0 0.0
    %1775 = vmatprep.subr.mxu0 0.0
    %1776 = vmatpush1.msra.mxu0 0.0
    %1777 = vmatprep.subr.mxu0 0.0
    %1778 = vmatpush1.msra.mxu0 0.0
    %1779 = vmatprep.subr.mxu0 0.0
    %1780 = vmatpush1.msra.mxu0 0.0
    %1781 = vmatprep.subr.mxu0 0.0
    %1782 = vmatpush1.msra.mxu0 0.0
    %1783 = vmatprep.subr.mxu0 0.0
    %1784 = vmatpush1.msra.mxu0 0.0
    %1785 = vmatprep.subr.mxu0 0.0
    %1786 = vmatpush1.msra.mxu0 0.0
    %1787 = vmatprep.subr.mxu0 0.0
    %1788 = vmatpush1.msra.mxu0 0.0
    %1789 = vmatprep.subr.mxu0 0.0
    %1790 = vmatpush1.msra.mxu0 0.0
    %1791 = vmatprep.subr.mxu0 0.0
    %1792 = vmatpush1.msra.mxu0 0.0
    %1793 = vmatprep.subr.mxu0 0.0
    %1794 = vmatpush1.msra.mxu0 0.0
    %1795 = vmatprep.subr.mxu0 0.0
    %1796 = vmatpush1.msra.mxu0 0.0
    %1797 = vmatprep.subr.mxu0 0.0
    %1798 = vmatpush1.msra.mxu0 0.0
    %1799 = vmatprep.subr.mxu0 0.0
    %1800 = vmatpush1.msra.mxu0 0.0
    %1801 = vmatprep.subr.mxu0 0.0
    %1802 = vmatpush1.msra.mxu0 0.0
    %1803 = vmatprep.subr.mxu0 0.0
    %1804 = vmatpush1.msra.mxu0 0.0
    %1805 = vmatprep.subr.mxu0 0.0
    %1806 = vmatpush1.msra.mxu0 0.0
    %1807 = vmatprep.mubr.f32.mxu0 0.0
    %1808 = vmatmul.mubr.f32.gmra.mrb[0].mxu0 %v1738
    %v1809 = vpop.f32.mrb[0].mxu0
    %v1810 = vadd.f32 0.0, %v1809
    %v1811 = vpop.f32.mrb[0].mxu0
    %1812 = vmatprep.mubr.f32.mxu0 0.0
    %1813 = vmatmul.mubr.f32.gmra.mrb[0].mxu0 %v1741
    %v1814 = vpop.f32.mrb[0].mxu0
    %v1815 = vadd.f32 0.0, %v1814
    %v1816 = vpop.f32.mrb[0].mxu0
    %1817 = vdwg.mxu0
    %v1818 = vadd.f32 %v1534, %v1810
    %v1819 = vadd.f32 %v1535, %v1815
    %v1820 = vld [vmem:[%s8] sm:$0x1]
    %v1822 = vlaneseq
    %v1823 = vshrl.u32 %v1822, 7
    %v1824 = vsub.s32 0, %v1823
    %v1825 = vrot.slane %v1820, %v1824
    %v1827 = vadd.f32 %v1818, %v1825
    %v1828 = vadd.f32 %v1819, %v1825
    %v1829 = vadd.f32 %v1827, %v40
    %v1830 = vadd.f32 %v1828, %v41
    %v1831 = vsel %vm61, %v1829, 0.0
    %1832 = vadd.xlane.f32.xlu0 %v1831
    %v1833 = vpop.xlane.xlu0 %1832
    %v1834 = vsel %vm61, %v1830, 0.0
    %1835 = vadd.xlane.f32.xlu0 %v1834
    %v1836 = vpop.xlane.xlu0 %1835
    %v1837 = vrcp.pop 32.0
    %v1838 = vmul.f32 %v1833, %v1837
    %v1839 = vmul.f32 %v1836, %v1837
    %v1840 = vsub.f32 %v1829, %v1838
    %v1841 = vsub.f32 %v1830, %v1839
    %v1842 = vmul.f32 %v1840, %v1840
    %v1843 = vmul.f32 %v1841, %v1841
    %v1844 = vsel %vm61, %v1842, 0.0
    %1845 = vadd.xlane.f32.xlu0 %v1844
    %v1846 = vpop.xlane.xlu0 %1845
    %v1847 = vsel %vm61, %v1843, 0.0
    %1848 = vadd.xlane.f32.xlu0 %v1847
    %v1849 = vpop.xlane.xlu0 %1848
    %v1850 = vmul.f32 %v1846, %v1837
    %v1851 = vmul.f32 %v1849, %v1837
    %v1852 = vadd.f32 %v1850, 1e-05
    %v1853 = vadd.f32 %v1851, 1e-05
    %v1854 = vrsqrt.pop %v1852
    %v1855 = vrsqrt.pop %v1853
    %v1856 = vmul.f32 %v1840, %v1854
    %v1857 = vmul.f32 %v1841, %v1855
    %v1858 = vld [vmem:[%s9] sm:$0x1]
    %v1860 = vlaneseq
    %v1861 = vshrl.u32 %v1860, 7
    %v1862 = vsub.s32 0, %v1861
    %v1863 = vrot.slane %v1858, %v1862
    %v1865 = vmul.f32 %v1856, %v1863
    %v1866 = vmul.f32 %v1857, %v1863
    %v1867 = vld [vmem:[%s10] sm:$0x1]
    %v1869 = vlaneseq
    %v1870 = vshrl.u32 %v1869, 7
    %v1871 = vsub.s32 0, %v1870
    %v1872 = vrot.slane %v1867, %v1871
    %v1874 = vadd.f32 %v1865, %v1872
    %v1875 = vadd.f32 %v1866, %v1872
    %1876 = vst.msk [vmem:[#allocation2] sm:$0xff] %vm61, %v1874
    %1877 = vst.msk [vmem:[#allocation2 + $0x8] sm:$0xff] %vm61, %v1875
    // Predicated region
    $region46: #{tpu_custom_call.1} parent=1 // pred_check
      _
    $region47: #{tpu_custom_call.1} parent=1 // pred_check_branch
      %1879 = sbr.rel (0) target = $region49
    $region48: #{tpu_custom_call.1} parent=1 // pred_region
      %s1881 = ssub.s32 256, 256
      %1882 = vsyncadd [#allocation3], %s1881
      %s1883 = sshll.u32 [#allocation2], 4
      %s1884 = int_to_ptr.vmem [resolvable:$true] %s1883
      %1889 = dma.vmem_to_hbm [thread:$0]  %s1884, 256, %s11, [#allocation3], 128, 128, 8
    $region49: #{tpu_custom_call.1} parent=1 // pred_fallthru
      _
    // Predicated region
    $region50: #{tpu_custom_call.1} parent=1 // pred_check
      _
    $region51: #{tpu_custom_call.1} parent=1 // pred_check_branch
      %1891 = sbr.rel (0) target = $region53
    $region52: #{tpu_custom_call.1} parent=1 // pred_region
      %1892 = dma.done [#allocation3], 256
    $region53: #{tpu_custom_call.1} parent=1 // pred_fallthru
      _
    %1893 = vsyncpa [#allocation3], 1

</llo_original>
